<compile_context>
chip_gen: v7x
topology: tpu7x:2x2x1
jax: 0.10.0
libtpu: 0.0.40
codegen_flags: <defaults>
</compile_context>

<pallas_src>
import jax
import jax.numpy as jnp
from jax.experimental import pallas as pl
from jax.experimental.pallas import tpu as pltpu


def _softplus(x):
    # numerically stable softplus: max(x,0) + log1p(exp(-|x|))
    return jnp.maximum(x, 0.0) + jnp.log1p(jnp.exp(-jnp.abs(x)))


def cvae_kernel(
    # fused batch-tiled input: [TB, cond+tgt+latent] = [c | x | eps]
    in_ref,
    # encoder params (layer 0 unsplit; head split into mu / logvar columns)
    ew0_ref, eb0_ref,
    ew1_ref, eb1_ref,
    ew2mu_ref, eb2mu_ref, ew2lv_ref, eb2lv_ref,
    # decoder params (layer 0 split into c-part / z-part; head split into mu / logvar)
    dw0c_ref, dw0z_ref, db0_ref,
    dw1mu_ref, db1mu_ref, dw1lv_ref, db1lv_ref,
    # single packed, 128-lane-padded output slab: [TB, OUT_W]
    # layout: [latentMu | latentLogVar | z | xMu | xLogVar | zero-pad]
    out_ref,
):
    cond = dw0c_ref.shape[0]            # condition_dim
    ct = ew0_ref.shape[0]               # condition_dim + target_dim
    L = dw0z_ref.shape[0]               # latent_dim
    T = dw1mu_ref.shape[1]              # target_dim

    fused = in_ref[...]
    cx = fused[:, :ct]                  # [c, x] for the encoder (lane-prefix slice)
    c = fused[:, :cond]                 # c alone for the decoder (lane-prefix slice)
    eps = fused[:, ct:ct + L]           # eps for reparameterization

    # ---------------- encoder: BlockModel with Softplus activations ----------------
    h = _softplus(
        jnp.dot(cx, ew0_ref[...], preferred_element_type=jnp.float32) + eb0_ref[...]
    )
    h = _softplus(
        jnp.dot(h, ew1_ref[...], preferred_element_type=jnp.float32) + eb1_ref[...]
    )
    latent_mu = (
        jnp.dot(h, ew2mu_ref[...], preferred_element_type=jnp.float32) + eb2mu_ref[...]
    )
    latent_logvar = jnp.clip(
        jnp.dot(h, ew2lv_ref[...], preferred_element_type=jnp.float32) + eb2lv_ref[...],
        -16.0, 16.0,
    )

    # -------------- reparameterization: z = mu + exp(0.5*logVar) * eps --------------
    z = latent_mu + jnp.exp(latent_logvar * 0.5) * eps

    # ---------------- decoder: BlockModel with ReLU activations ----------------
    h2 = jnp.maximum(
        jnp.dot(c, dw0c_ref[...], preferred_element_type=jnp.float32)
        + jnp.dot(z, dw0z_ref[...], preferred_element_type=jnp.float32)
        + db0_ref[...],
        0.0,
    )
    x_mu = (
        jnp.dot(h2, dw1mu_ref[...], preferred_element_type=jnp.float32) + db1mu_ref[...]
    )
    x_logvar = jnp.clip(
        jnp.dot(h2, dw1lv_ref[...], preferred_element_type=jnp.float32) + db1lv_ref[...],
        -16.0, 16.0,
    )

    # single lane-dense full-width store (wrapper slices logical outputs back out)
    packed = jnp.concatenate([latent_mu, latent_logvar, z, x_mu, x_logvar], axis=-1)
    pad = out_ref.shape[-1] - packed.shape[-1]
    if pad:
        packed = jnp.concatenate(
            [packed, jnp.zeros((packed.shape[0], pad), jnp.float32)], axis=-1
        )
    out_ref[...] = packed


_WEIGHT_ORDER = (
    "ew0", "eb0",
    "ew1", "eb1",
    "ew2_mu", "eb2_mu", "ew2_lv", "eb2_lv",
    "dw0c", "dw0z", "db0",
    "dw1_mu", "db1_mu", "dw1_lv", "db1_lv",
)


def _num_tc_splits():
    """2 tiles on v7x (2 TensorCores/chip), else 1 (v5e/v6e are single-TC)."""
    try:
        kind = jax.devices()[0].device_kind.lower()
    except Exception:
        return 1
    return 2 if "v7" in kind else 1


def cvae_forward(c, x, eps, params, *, block_batch=None):
    """params: dict of pre-transposed (in, out) weights and (1, out) biases."""
    B, cond_dim = c.shape
    tgt_dim = x.shape[1]
    L = eps.shape[1]
    T = params["dw1_mu"].shape[1]
    in_w = cond_dim + tgt_dim + L

    # Fused lane-dense input slab: one DMA stream per grid step.
    fused_in = jnp.concatenate([c, x, eps], axis=-1).astype(jnp.float32)

    # Pick the largest batch tile: whole batch on v5e/v6e, balanced halves on v7x.
    if block_batch is None:
        splits = _num_tc_splits()
        tb = -(-B // splits)
    else:
        tb = block_batch
    TB = max(8, ((tb + 7) // 8) * 8)  # f32 sublane multiple

    B_pad = ((B + TB - 1) // TB) * TB
    if B_pad != B:
        fused_in = jnp.pad(fused_in, ((0, B_pad - B), (0, 0)))
    num_tiles = B_pad // TB

    out_logical = 3 * L + 2 * T
    OUT_W = ((out_logical + 127) // 128) * 128  # lane-dense full-width output slab

    weights = [params[name] for name in _WEIGHT_ORDER]

    in_specs = (
        [pl.BlockSpec((TB, in_w), lambda i: (i, 0))]
        # full-shape block, same block every grid step -> stays resident in VMEM
        + [pl.BlockSpec(w.shape, lambda i: (0, 0)) for w in weights]
    )

    out_shape = jax.ShapeDtypeStruct((B_pad, OUT_W), jnp.float32)
    out_specs = pl.BlockSpec((TB, OUT_W), lambda i: (i, 0))

    fn = pl.pallas_call(
        cvae_kernel,
        out_shape=out_shape,
        grid_spec=pltpu.PrefetchScalarGridSpec(
            num_scalar_prefetch=0,
            grid=(num_tiles,),
            in_specs=in_specs,
            out_specs=out_specs,
        ),
        compiler_params=pltpu.CompilerParams(
            dimension_semantics=("parallel",),  # shards the 2 tiles across v7x's TCs
        ),
    )
    out = fn(fused_in, *weights)[:B]

    latent_mu = out[:, 0:L]
    latent_logvar = out[:, L:2 * L]
    z = out[:, 2 * L:3 * L]
    x_mu = out[:, 3 * L:3 * L + T]
    x_logvar = out[:, 3 * L + T:3 * L + 2 * T]
    return latent_mu, latent_logvar, z, x_mu, x_logvar


def _xavier_uniform(key, fan_in, fan_out):
    bound = jnp.sqrt(6.0 / (fan_in + fan_out))
    return jax.random.uniform(key, (fan_in, fan_out), jnp.float32, -bound, bound)


def _bias(key, fan_in, fan_out):
    bound = 1.0 / jnp.sqrt(jnp.float32(fan_in))
    return jax.random.uniform(key, (1, fan_out), jnp.float32, -bound, bound)


def make_params(key, condition_dim, target_dim, latent_dim, width):
    # encoder: Linear(cd+td, 3w) Softplus, Linear(3w, 3w) Softplus, Linear(3w, 2*latent)
    # decoder: Linear(cd+latent, w) ReLU, Linear(w, 2*target)
    w3 = width * 3
    keys = jax.random.split(key, 10)

    ew2 = _xavier_uniform(keys[4], w3, 2 * latent_dim)
    eb2 = _bias(keys[5], w3, 2 * latent_dim)
    dw0 = _xavier_uniform(keys[6], condition_dim + latent_dim, width)
    dw1 = _xavier_uniform(keys[8], width, 2 * target_dim)
    db1 = _bias(keys[9], width, 2 * target_dim)

    return {
        # encoder layer 0 (unsplit; applied to the fused [c, x] lanes)
        "ew0": _xavier_uniform(keys[0], condition_dim + target_dim, w3),
        "eb0": _bias(keys[1], condition_dim + target_dim, w3),
        # encoder layer 1
        "ew1": _xavier_uniform(keys[2], w3, w3),
        "eb1": _bias(keys[3], w3, w3),
        # encoder head, split into mu / logvar columns (== chunk(2, dim=-1))
        "ew2_mu": ew2[:, :latent_dim],
        "ew2_lv": ew2[:, latent_dim:],
        "eb2_mu": eb2[:, :latent_dim],
        "eb2_lv": eb2[:, latent_dim:],
        # decoder layer 0, split by the [c, z] concatenation (z is produced in-kernel)
        "dw0c": dw0[:condition_dim, :],
        "dw0z": dw0[condition_dim:, :],
        "db0": _bias(keys[7], condition_dim + latent_dim, width),
        # decoder head, split into mu / logvar columns
        "dw1_mu": dw1[:, :target_dim],
        "dw1_lv": dw1[:, target_dim:],
        "db1_mu": db1[:, :target_dim],
        "db1_lv": db1[:, target_dim:],
    }


def reference_forward(c, x, eps, p):
    cx = jnp.concatenate([c, x], axis=-1)
    h = jax.nn.softplus(cx @ p["ew0"] + p["eb0"])
    h = jax.nn.softplus(h @ p["ew1"] + p["eb1"])
    lmu = h @ p["ew2_mu"] + p["eb2_mu"]
    llv = jnp.clip(h @ p["ew2_lv"] + p["eb2_lv"], -16.0, 16.0)
    z = lmu + jnp.exp(0.5 * llv) * eps
    h2 = jax.nn.relu(c @ p["dw0c"] + z @ p["dw0z"] + p["db0"])
    xmu = h2 @ p["dw1_mu"] + p["db1_mu"]
    xlv = jnp.clip(h2 @ p["dw1_lv"] + p["db1_lv"], -16.0, 16.0)
    return lmu, llv, z, xmu, xlv


if __name__ == "__main__":
    # shapes consistent with CVAEModel.forward:
    #   c: [batch, condition_dim], x: [batch, target_dim], eps ~ randn_like(latentMu)
    # batch deliberately NOT a multiple of 8 to exercise padding/rounding.
    batch, condition_dim, target_dim, latent_dim, width = 100, 8, 8, 8, 32

    key = jax.random.PRNGKey(0)
    k_c, k_x, k_eps, k_p = jax.random.split(key, 4)
    c = jax.random.normal(k_c, (batch, condition_dim), jnp.float32)
    x = jax.random.normal(k_x, (batch, target_dim), jnp.float32)
    # eps plays the role of torch.randn_like(mu) in GaussianModel.sample
    eps = jax.random.normal(k_eps, (batch, latent_dim), jnp.float32)

    params = make_params(k_p, condition_dim, target_dim, latent_dim, width)

    outs = cvae_forward(c, x, eps, params)
    outs = jax.block_until_ready(outs)

    refs = reference_forward(c, x, eps, params)
    for got, want in zip(outs, refs):
        assert got.shape == want.shape and got.dtype == want.dtype
        assert jnp.allclose(got, want, atol=1e-5, rtol=1e-5), "mismatch vs JAX reference"

    print("KERNEL_OK")
</pallas_src>

<mosaic_0001>
module attributes {stable_mosaic.version = 11 : i64} {
  func.func @cvae_kernel(%arg0: i32, %arg1: memref<104x24xf32, #tpu.memory_space<vmem>>, %arg2: memref<16x96xf32, #tpu.memory_space<vmem>>, %arg3: memref<1x96xf32, #tpu.memory_space<vmem>>, %arg4: memref<96x96xf32, #tpu.memory_space<vmem>>, %arg5: memref<1x96xf32, #tpu.memory_space<vmem>>, %arg6: memref<96x8xf32, #tpu.memory_space<vmem>>, %arg7: memref<1x8xf32, #tpu.memory_space<vmem>>, %arg8: memref<96x8xf32, #tpu.memory_space<vmem>>, %arg9: memref<1x8xf32, #tpu.memory_space<vmem>>, %arg10: memref<8x32xf32, #tpu.memory_space<vmem>>, %arg11: memref<8x32xf32, #tpu.memory_space<vmem>>, %arg12: memref<1x32xf32, #tpu.memory_space<vmem>>, %arg13: memref<32x8xf32, #tpu.memory_space<vmem>>, %arg14: memref<1x8xf32, #tpu.memory_space<vmem>>, %arg15: memref<32x8xf32, #tpu.memory_space<vmem>>, %arg16: memref<1x8xf32, #tpu.memory_space<vmem>>, %arg17: memref<104x128xf32, #tpu.memory_space<vmem>>) attributes {dimension_semantics = [#tpu.dimension_semantics<parallel>], iteration_bounds = array<i64: 1>, scalar_prefetch = 0 : i64, scratch_operands = 0 : i64, tpu.core_type = #tpu.core_type<tc>, window_params = [{transform_indices = @transform_0, window_bounds = array<i64: 104, 24>}, {pipeline_mode = #tpu.pipeline_mode<synchronous>, transform_indices = @transform_1, window_bounds = array<i64: 16, 96>}, {pipeline_mode = #tpu.pipeline_mode<synchronous>, transform_indices = @transform_2, window_bounds = array<i64: 1, 96>}, {pipeline_mode = #tpu.pipeline_mode<synchronous>, transform_indices = @transform_3, window_bounds = array<i64: 96, 96>}, {pipeline_mode = #tpu.pipeline_mode<synchronous>, transform_indices = @transform_4, window_bounds = array<i64: 1, 96>}, {pipeline_mode = #tpu.pipeline_mode<synchronous>, transform_indices = @transform_5, window_bounds = array<i64: 96, 8>}, {pipeline_mode = #tpu.pipeline_mode<synchronous>, transform_indices = @transform_6, window_bounds = array<i64: 1, 8>}, {pipeline_mode = #tpu.pipeline_mode<synchronous>, transform_indices = @transform_7, window_bounds = array<i64: 96, 8>}, {pipeline_mode = #tpu.pipeline_mode<synchronous>, transform_indices = @transform_8, window_bounds = array<i64: 1, 8>}, {pipeline_mode = #tpu.pipeline_mode<synchronous>, transform_indices = @transform_9, window_bounds = array<i64: 8, 32>}, {pipeline_mode = #tpu.pipeline_mode<synchronous>, transform_indices = @transform_10, window_bounds = array<i64: 8, 32>}, {pipeline_mode = #tpu.pipeline_mode<synchronous>, transform_indices = @transform_11, window_bounds = array<i64: 1, 32>}, {pipeline_mode = #tpu.pipeline_mode<synchronous>, transform_indices = @transform_12, window_bounds = array<i64: 32, 8>}, {pipeline_mode = #tpu.pipeline_mode<synchronous>, transform_indices = @transform_13, window_bounds = array<i64: 1, 8>}, {pipeline_mode = #tpu.pipeline_mode<synchronous>, transform_indices = @transform_14, window_bounds = array<i64: 32, 8>}, {pipeline_mode = #tpu.pipeline_mode<synchronous>, transform_indices = @transform_15, window_bounds = array<i64: 1, 8>}, {transform_indices = @transform_16, window_bounds = array<i64: 104, 128>}]} {
    %c0 = arith.constant 0 : index
    %c0_0 = arith.constant 0 : index
    %0 = vector.load %arg1[%c0, %c0_0] : memref<104x24xf32, #tpu.memory_space<vmem>>, vector<104x24xf32>
    %1 = vector.extract_strided_slice %0 {offsets = [0, 0], sizes = [104, 16], strides = [1, 1]} : vector<104x24xf32> to vector<104x16xf32>
    %2 = vector.extract_strided_slice %0 {offsets = [0, 0], sizes = [104, 8], strides = [1, 1]} : vector<104x24xf32> to vector<104x8xf32>
    %3 = vector.extract_strided_slice %0 {offsets = [0, 16], sizes = [104, 8], strides = [1, 1]} : vector<104x24xf32> to vector<104x8xf32>
    %c0_1 = arith.constant 0 : index
    %c0_2 = arith.constant 0 : index
    %4 = vector.load %arg2[%c0_1, %c0_2] : memref<16x96xf32, #tpu.memory_space<vmem>>, vector<16x96xf32>
    %cst = arith.constant dense<0.000000e+00> : vector<104x96xf32>
    %5 = tpu.matmul %1, %4, %cst {dimension_numbers = #tpu.dot_dimension_numbers<[1], [0], [0], [1], [0, 0, 1, 1], [], []>} : vector<104x16xf32>, vector<16x96xf32>, vector<104x96xf32> -> vector<104x96xf32>
    %c0_3 = arith.constant 0 : index
    %c0_4 = arith.constant 0 : index
    %6 = vector.load %arg3[%c0_3, %c0_4] : memref<1x96xf32, #tpu.memory_space<vmem>>, vector<1x96xf32>
    %7 = vector.broadcast %6 : vector<1x96xf32> to vector<104x96xf32>
    %8 = arith.addf %5, %7 : vector<104x96xf32>
    %cst_5 = arith.constant 0.000000e+00 : f32
    %9 = vector.broadcast %cst_5 : f32 to vector<104x96xf32>
    %10 = arith.maximumf %8, %9 : vector<104x96xf32>
    %11 = math.absf %8 : vector<104x96xf32>
    %cst_6 = arith.constant 0.000000e+00 : f32
    %12 = vector.broadcast %cst_6 : f32 to vector<104x96xf32>
    %13 = arith.subf %12, %11 : vector<104x96xf32>
    %14 = math.exp %13 : vector<104x96xf32>
    %15 = math.log1p %14 : vector<104x96xf32>
    %16 = arith.addf %10, %15 : vector<104x96xf32>
    %c0_7 = arith.constant 0 : index
    %c0_8 = arith.constant 0 : index
    %17 = vector.load %arg4[%c0_7, %c0_8] : memref<96x96xf32, #tpu.memory_space<vmem>>, vector<96x96xf32>
    %cst_9 = arith.constant dense<0.000000e+00> : vector<104x96xf32>
    %18 = tpu.matmul %16, %17, %cst_9 {dimension_numbers = #tpu.dot_dimension_numbers<[1], [0], [0], [1], [0, 0, 1, 1], [], []>} : vector<104x96xf32>, vector<96x96xf32>, vector<104x96xf32> -> vector<104x96xf32>
    %c0_10 = arith.constant 0 : index
    %c0_11 = arith.constant 0 : index
    %19 = vector.load %arg5[%c0_10, %c0_11] : memref<1x96xf32, #tpu.memory_space<vmem>>, vector<1x96xf32>
    %20 = vector.broadcast %19 : vector<1x96xf32> to vector<104x96xf32>
    %21 = arith.addf %18, %20 : vector<104x96xf32>
    %cst_12 = arith.constant 0.000000e+00 : f32
    %22 = vector.broadcast %cst_12 : f32 to vector<104x96xf32>
    %23 = arith.maximumf %21, %22 : vector<104x96xf32>
    %24 = math.absf %21 : vector<104x96xf32>
    %cst_13 = arith.constant 0.000000e+00 : f32
    %25 = vector.broadcast %cst_13 : f32 to vector<104x96xf32>
    %26 = arith.subf %25, %24 : vector<104x96xf32>
    %27 = math.exp %26 : vector<104x96xf32>
    %28 = math.log1p %27 : vector<104x96xf32>
    %29 = arith.addf %23, %28 : vector<104x96xf32>
    %c0_14 = arith.constant 0 : index
    %c0_15 = arith.constant 0 : index
    %30 = vector.load %arg6[%c0_14, %c0_15] : memref<96x8xf32, #tpu.memory_space<vmem>>, vector<96x8xf32>
    %cst_16 = arith.constant dense<0.000000e+00> : vector<104x8xf32>
    %31 = tpu.matmul %29, %30, %cst_16 {dimension_numbers = #tpu.dot_dimension_numbers<[1], [0], [0], [1], [0, 0, 1, 1], [], []>} : vector<104x96xf32>, vector<96x8xf32>, vector<104x8xf32> -> vector<104x8xf32>
    %c0_17 = arith.constant 0 : index
    %c0_18 = arith.constant 0 : index
    %32 = vector.load %arg7[%c0_17, %c0_18] : memref<1x8xf32, #tpu.memory_space<vmem>>, vector<1x8xf32>
    %33 = vector.broadcast %32 : vector<1x8xf32> to vector<104x8xf32>
    %34 = arith.addf %31, %33 : vector<104x8xf32>
    %c0_19 = arith.constant 0 : index
    %c0_20 = arith.constant 0 : index
    %35 = vector.load %arg8[%c0_19, %c0_20] : memref<96x8xf32, #tpu.memory_space<vmem>>, vector<96x8xf32>
    %cst_21 = arith.constant dense<0.000000e+00> : vector<104x8xf32>
    %36 = tpu.matmul %29, %35, %cst_21 {dimension_numbers = #tpu.dot_dimension_numbers<[1], [0], [0], [1], [0, 0, 1, 1], [], []>} : vector<104x96xf32>, vector<96x8xf32>, vector<104x8xf32> -> vector<104x8xf32>
    %c0_22 = arith.constant 0 : index
    %c0_23 = arith.constant 0 : index
    %37 = vector.load %arg9[%c0_22, %c0_23] : memref<1x8xf32, #tpu.memory_space<vmem>>, vector<1x8xf32>
    %38 = vector.broadcast %37 : vector<1x8xf32> to vector<104x8xf32>
    %39 = arith.addf %36, %38 : vector<104x8xf32>
    %cst_24 = arith.constant -1.600000e+01 : f32
    %cst_25 = arith.constant 1.600000e+01 : f32
    %40 = vector.broadcast %cst_24 : f32 to vector<104x8xf32>
    %41 = arith.maximumf %40, %39 : vector<104x8xf32>
    %42 = vector.broadcast %cst_25 : f32 to vector<104x8xf32>
    %43 = arith.minimumf %42, %41 : vector<104x8xf32>
    %cst_26 = arith.constant 5.000000e-01 : f32
    %44 = vector.broadcast %cst_26 : f32 to vector<104x8xf32>
    %45 = arith.mulf %43, %44 : vector<104x8xf32>
    %46 = math.exp %45 : vector<104x8xf32>
    %47 = arith.mulf %46, %3 : vector<104x8xf32>
    %48 = arith.addf %34, %47 : vector<104x8xf32>
    %c0_27 = arith.constant 0 : index
    %c0_28 = arith.constant 0 : index
    %49 = vector.load %arg10[%c0_27, %c0_28] : memref<8x32xf32, #tpu.memory_space<vmem>>, vector<8x32xf32>
    %cst_29 = arith.constant dense<0.000000e+00> : vector<104x32xf32>
    %50 = tpu.matmul %2, %49, %cst_29 {dimension_numbers = #tpu.dot_dimension_numbers<[1], [0], [0], [1], [0, 0, 1, 1], [], []>} : vector<104x8xf32>, vector<8x32xf32>, vector<104x32xf32> -> vector<104x32xf32>
    %c0_30 = arith.constant 0 : index
    %c0_31 = arith.constant 0 : index
    %51 = vector.load %arg11[%c0_30, %c0_31] : memref<8x32xf32, #tpu.memory_space<vmem>>, vector<8x32xf32>
    %cst_32 = arith.constant dense<0.000000e+00> : vector<104x32xf32>
    %52 = tpu.matmul %48, %51, %cst_32 {dimension_numbers = #tpu.dot_dimension_numbers<[1], [0], [0], [1], [0, 0, 1, 1], [], []>} : vector<104x8xf32>, vector<8x32xf32>, vector<104x32xf32> -> vector<104x32xf32>
    %53 = arith.addf %50, %52 : vector<104x32xf32>
    %c0_33 = arith.constant 0 : index
    %c0_34 = arith.constant 0 : index
    %54 = vector.load %arg12[%c0_33, %c0_34] : memref<1x32xf32, #tpu.memory_space<vmem>>, vector<1x32xf32>
    %55 = vector.broadcast %54 : vector<1x32xf32> to vector<104x32xf32>
    %56 = arith.addf %53, %55 : vector<104x32xf32>
    %cst_35 = arith.constant 0.000000e+00 : f32
    %57 = vector.broadcast %cst_35 : f32 to vector<104x32xf32>
    %58 = arith.maximumf %56, %57 : vector<104x32xf32>
    %c0_36 = arith.constant 0 : index
    %c0_37 = arith.constant 0 : index
    %59 = vector.load %arg13[%c0_36, %c0_37] : memref<32x8xf32, #tpu.memory_space<vmem>>, vector<32x8xf32>
    %cst_38 = arith.constant dense<0.000000e+00> : vector<104x8xf32>
    %60 = tpu.matmul %58, %59, %cst_38 {dimension_numbers = #tpu.dot_dimension_numbers<[1], [0], [0], [1], [0, 0, 1, 1], [], []>} : vector<104x32xf32>, vector<32x8xf32>, vector<104x8xf32> -> vector<104x8xf32>
    %c0_39 = arith.constant 0 : index
    %c0_40 = arith.constant 0 : index
    %61 = vector.load %arg14[%c0_39, %c0_40] : memref<1x8xf32, #tpu.memory_space<vmem>>, vector<1x8xf32>
    %62 = vector.broadcast %61 : vector<1x8xf32> to vector<104x8xf32>
    %63 = arith.addf %60, %62 : vector<104x8xf32>
    %c0_41 = arith.constant 0 : index
    %c0_42 = arith.constant 0 : index
    %64 = vector.load %arg15[%c0_41, %c0_42] : memref<32x8xf32, #tpu.memory_space<vmem>>, vector<32x8xf32>
    %cst_43 = arith.constant dense<0.000000e+00> : vector<104x8xf32>
    %65 = tpu.matmul %58, %64, %cst_43 {dimension_numbers = #tpu.dot_dimension_numbers<[1], [0], [0], [1], [0, 0, 1, 1], [], []>} : vector<104x32xf32>, vector<32x8xf32>, vector<104x8xf32> -> vector<104x8xf32>
    %c0_44 = arith.constant 0 : index
    %c0_45 = arith.constant 0 : index
    %66 = vector.load %arg16[%c0_44, %c0_45] : memref<1x8xf32, #tpu.memory_space<vmem>>, vector<1x8xf32>
    %67 = vector.broadcast %66 : vector<1x8xf32> to vector<104x8xf32>
    %68 = arith.addf %65, %67 : vector<104x8xf32>
    %cst_46 = arith.constant -1.600000e+01 : f32
    %cst_47 = arith.constant 1.600000e+01 : f32
    %69 = vector.broadcast %cst_46 : f32 to vector<104x8xf32>
    %70 = arith.maximumf %69, %68 : vector<104x8xf32>
    %71 = vector.broadcast %cst_47 : f32 to vector<104x8xf32>
    %72 = arith.minimumf %71, %70 : vector<104x8xf32>
    %73 = tpu.concatenate %34, %43, %48, %63, %72 in 1 : vector<104x8xf32>, vector<104x8xf32>, vector<104x8xf32>, vector<104x8xf32>, vector<104x8xf32> -> vector<104x40xf32>
    %cst_48 = arith.constant 0.000000e+00 : f32
    %74 = vector.broadcast %cst_48 : f32 to vector<104x88xf32>
    %75 = tpu.concatenate %73, %74 in 1 : vector<104x40xf32>, vector<104x88xf32> -> vector<104x128xf32>
    %c0_49 = arith.constant 0 : index
    %c0_50 = arith.constant 0 : index
    %76 = vector.load %arg17[%c0_49, %c0_50] : memref<104x128xf32, #tpu.memory_space<vmem>>, vector<104x128xf32>
    tpu.vector_store %arg17[%c0_49, %c0_50], %75 {strides = array<i32>} : memref<104x128xf32, #tpu.memory_space<vmem>>, vector<104x128xf32>,
    return
  }
  func.func @transform_0(%arg0: i32) -> (i32, i32) {
    %c0_i32 = arith.constant 0 : i32
    %c0_i32_0 = arith.constant 0 : i32
    return %arg0, %c0_i32 : i32, i32
  }
  func.func @transform_1(%arg0: i32) -> (i32, i32) {
    %c0_i32 = arith.constant 0 : i32
    %c0_i32_0 = arith.constant 0 : i32
    %c0_i32_1 = arith.constant 0 : i32
    return %c0_i32, %c0_i32_0 : i32, i32
  }
  func.func @transform_2(%arg0: i32) -> (i32, i32) {
    %c0_i32 = arith.constant 0 : i32
    %c0_i32_0 = arith.constant 0 : i32
    %c0_i32_1 = arith.constant 0 : i32
    return %c0_i32, %c0_i32_0 : i32, i32
  }
  func.func @transform_3(%arg0: i32) -> (i32, i32) {
    %c0_i32 = arith.constant 0 : i32
    %c0_i32_0 = arith.constant 0 : i32
    %c0_i32_1 = arith.constant 0 : i32
    return %c0_i32, %c0_i32_0 : i32, i32
  }
  func.func @transform_4(%arg0: i32) -> (i32, i32) {
    %c0_i32 = arith.constant 0 : i32
    %c0_i32_0 = arith.constant 0 : i32
    %c0_i32_1 = arith.constant 0 : i32
    return %c0_i32, %c0_i32_0 : i32, i32
  }
  func.func @transform_5(%arg0: i32) -> (i32, i32) {
    %c0_i32 = arith.constant 0 : i32
    %c0_i32_0 = arith.constant 0 : i32
    %c0_i32_1 = arith.constant 0 : i32
    return %c0_i32, %c0_i32_0 : i32, i32
  }
  func.func @transform_6(%arg0: i32) -> (i32, i32) {
    %c0_i32 = arith.constant 0 : i32
    %c0_i32_0 = arith.constant 0 : i32
    %c0_i32_1 = arith.constant 0 : i32
    return %c0_i32, %c0_i32_0 : i32, i32
  }
  func.func @transform_7(%arg0: i32) -> (i32, i32) {
    %c0_i32 = arith.constant 0 : i32
    %c0_i32_0 = arith.constant 0 : i32
    %c0_i32_1 = arith.constant 0 : i32
    return %c0_i32, %c0_i32_0 : i32, i32
  }
  func.func @transform_8(%arg0: i32) -> (i32, i32) {
    %c0_i32 = arith.constant 0 : i32
    %c0_i32_0 = arith.constant 0 : i32
    %c0_i32_1 = arith.constant 0 : i32
    return %c0_i32, %c0_i32_0 : i32, i32
  }
  func.func @transform_9(%arg0: i32) -> (i32, i32) {
    %c0_i32 = arith.constant 0 : i32
    %c0_i32_0 = arith.constant 0 : i32
    %c0_i32_1 = arith.constant 0 : i32
    return %c0_i32, %c0_i32_0 : i32, i32
  }
  func.func @transform_10(%arg0: i32) -> (i32, i32) {
    %c0_i32 = arith.constant 0 : i32
    %c0_i32_0 = arith.constant 0 : i32
    %c0_i32_1 = arith.constant 0 : i32
    return %c0_i32, %c0_i32_0 : i32, i32
  }
  func.func @transform_11(%arg0: i32) -> (i32, i32) {
    %c0_i32 = arith.constant 0 : i32
    %c0_i32_0 = arith.constant 0 : i32
    %c0_i32_1 = arith.constant 0 : i32
    return %c0_i32, %c0_i32_0 : i32, i32
  }
  func.func @transform_12(%arg0: i32) -> (i32, i32) {
    %c0_i32 = arith.constant 0 : i32
    %c0_i32_0 = arith.constant 0 : i32
    %c0_i32_1 = arith.constant 0 : i32
    return %c0_i32, %c0_i32_0 : i32, i32
  }
  func.func @transform_13(%arg0: i32) -> (i32, i32) {
    %c0_i32 = arith.constant 0 : i32
    %c0_i32_0 = arith.constant 0 : i32
    %c0_i32_1 = arith.constant 0 : i32
    return %c0_i32, %c0_i32_0 : i32, i32
  }
  func.func @transform_14(%arg0: i32) -> (i32, i32) {
    %c0_i32 = arith.constant 0 : i32
    %c0_i32_0 = arith.constant 0 : i32
    %c0_i32_1 = arith.constant 0 : i32
    return %c0_i32, %c0_i32_0 : i32, i32
  }
  func.func @transform_15(%arg0: i32) -> (i32, i32) {
    %c0_i32 = arith.constant 0 : i32
    %c0_i32_0 = arith.constant 0 : i32
    %c0_i32_1 = arith.constant 0 : i32
    return %c0_i32, %c0_i32_0 : i32, i32
  }
  func.func @transform_16(%arg0: i32) -> (i32, i32) {
    %c0_i32 = arith.constant 0 : i32
    %c0_i32_0 = arith.constant 0 : i32
    return %arg0, %c0_i32 : i32, i32
  }
}

</mosaic_0001>

<llo_original>
// kernel: tpu_custom_call.1
$region0: #{tpu_custom_call.1}
  #allocation0 [shape = 'u32[]', space=smem, size = 0x4, offset = 0x4, fixed_abs, tag = 'smem constant byte address 0x4 - core index']
  #allocation1 [shape = 'u32[144,128]{1,0:T(1,128)}', space=vmem, size = 0x12000, scoped, tag = 'internal scratch']
  %s0 = inlined_call_operand.vmem [shape: f32[104,24], index: 0, kind: input, shape index: {}]
  %s1 = inlined_call_operand.vmem [shape: f32[16,96], index: 1, kind: input, shape index: {}]
  %s2 = inlined_call_operand.vmem [shape: f32[1,96], index: 2, kind: input, shape index: {}]
  %s3 = inlined_call_operand.vmem [shape: f32[96,96], index: 3, kind: input, shape index: {}]
  %s4 = inlined_call_operand.vmem [shape: f32[1,96], index: 4, kind: input, shape index: {}]
  %s5 = inlined_call_operand.vmem [shape: f32[96,8], index: 5, kind: input, shape index: {}]
  %s6 = inlined_call_operand.vmem [shape: f32[1,8], index: 6, kind: input, shape index: {}]
  %s7 = inlined_call_operand.vmem [shape: f32[96,8], index: 7, kind: input, shape index: {}]
  %s8 = inlined_call_operand.vmem [shape: f32[1,8], index: 8, kind: input, shape index: {}]
  %s9 = inlined_call_operand.vmem [shape: f32[8,32], index: 9, kind: input, shape index: {}]
  %s10 = inlined_call_operand.vmem [shape: f32[8,32], index: 10, kind: input, shape index: {}]
  %s11 = inlined_call_operand.vmem [shape: f32[1,32], index: 11, kind: input, shape index: {}]
  %s12 = inlined_call_operand.vmem [shape: f32[32,8], index: 12, kind: input, shape index: {}]
  %s13 = inlined_call_operand.vmem [shape: f32[1,8], index: 13, kind: input, shape index: {}]
  %s14 = inlined_call_operand.vmem [shape: f32[32,8], index: 14, kind: input, shape index: {}]
  %s15 = inlined_call_operand.vmem [shape: f32[1,8], index: 15, kind: input, shape index: {}]
  %s16 = inlined_call_operand.hbm [shape: f32[104,128], index: 16, kind: output, shape index: {}]
  %s17 = sld [smem:[#allocation0]]
  $region74: #{tpu_custom_call.1} parent=0
    _
  %s19 = ssub.s32 1, %s17
  %s20 = scalar_select 0, %s19, %s17
  $region1: #{tpu_custom_call.1} parent=0
    #allocation2 [shape = 'u8[53248]{0}', space=vmem, size = 0xd000, scoped, tag = 'output window, operand 0, single buffered']
    #allocation3 [shape = 's32[1]{0}', space=sflag, size = 0x4, scoped, tag = 'scoped memory for tpu_custom_call.1']
    %21 = vsyncpa [#allocation3], 0
    // Predicated region
    $region2: #{tpu_custom_call.1} parent=1 // pred_check
      _
    $region3: #{tpu_custom_call.1} parent=1 // pred_check_branch
      %23 = sbr.rel (0) target = $region5
    $region4: #{tpu_custom_call.1} parent=1 // pred_region
      _
    $region5: #{tpu_custom_call.1} parent=1 // pred_fallthru
      _
    // Predicated region
    $region6: #{tpu_custom_call.1} parent=1 // pred_check
      _
    $region7: #{tpu_custom_call.1} parent=1 // pred_check_branch
      %25 = sbr.rel (0) target = $region9
    $region8: #{tpu_custom_call.1} parent=1 // pred_region
      _
    $region9: #{tpu_custom_call.1} parent=1 // pred_fallthru
      _
    // Predicated region
    $region10: #{tpu_custom_call.1} parent=1 // pred_check
      _
    $region11: #{tpu_custom_call.1} parent=1 // pred_check_branch
      %27 = sbr.rel (0) target = $region13
    $region12: #{tpu_custom_call.1} parent=1 // pred_region
      _
    $region13: #{tpu_custom_call.1} parent=1 // pred_fallthru
      _
    // Predicated region
    $region14: #{tpu_custom_call.1} parent=1 // pred_check
      _
    $region15: #{tpu_custom_call.1} parent=1 // pred_check_branch
      %29 = sbr.rel (0) target = $region17
    $region16: #{tpu_custom_call.1} parent=1 // pred_region
      _
    $region17: #{tpu_custom_call.1} parent=1 // pred_fallthru
      _
    // Predicated region
    $region18: #{tpu_custom_call.1} parent=1 // pred_check
      _
    $region19: #{tpu_custom_call.1} parent=1 // pred_check_branch
      %31 = sbr.rel (0) target = $region21
    $region20: #{tpu_custom_call.1} parent=1 // pred_region
      _
    $region21: #{tpu_custom_call.1} parent=1 // pred_fallthru
      _
    // Predicated region
    $region22: #{tpu_custom_call.1} parent=1 // pred_check
      _
    $region23: #{tpu_custom_call.1} parent=1 // pred_check_branch
      %33 = sbr.rel (0) target = $region25
    $region24: #{tpu_custom_call.1} parent=1 // pred_region
      _
    $region25: #{tpu_custom_call.1} parent=1 // pred_fallthru
      _
    // Predicated region
    $region26: #{tpu_custom_call.1} parent=1 // pred_check
      _
    $region27: #{tpu_custom_call.1} parent=1 // pred_check_branch
      %35 = sbr.rel (0) target = $region29
    $region28: #{tpu_custom_call.1} parent=1 // pred_region
      _
    $region29: #{tpu_custom_call.1} parent=1 // pred_fallthru
      _
    // Predicated region
    $region30: #{tpu_custom_call.1} parent=1 // pred_check
      _
    $region31: #{tpu_custom_call.1} parent=1 // pred_check_branch
      %37 = sbr.rel (0) target = $region33
    $region32: #{tpu_custom_call.1} parent=1 // pred_region
      _
    $region33: #{tpu_custom_call.1} parent=1 // pred_fallthru
      _
    // Predicated region
    $region34: #{tpu_custom_call.1} parent=1 // pred_check
      _
    $region35: #{tpu_custom_call.1} parent=1 // pred_check_branch
      %39 = sbr.rel (0) target = $region37
    $region36: #{tpu_custom_call.1} parent=1 // pred_region
      _
    $region37: #{tpu_custom_call.1} parent=1 // pred_fallthru
      _
    // Predicated region
    $region38: #{tpu_custom_call.1} parent=1 // pred_check
      _
    $region39: #{tpu_custom_call.1} parent=1 // pred_check_branch
      %41 = sbr.rel (0) target = $region41
    $region40: #{tpu_custom_call.1} parent=1 // pred_region
      _
    $region41: #{tpu_custom_call.1} parent=1 // pred_fallthru
      _
    // Predicated region
    $region42: #{tpu_custom_call.1} parent=1 // pred_check
      _
    $region43: #{tpu_custom_call.1} parent=1 // pred_check_branch
      %43 = sbr.rel (0) target = $region45
    $region44: #{tpu_custom_call.1} parent=1 // pred_region
      _
    $region45: #{tpu_custom_call.1} parent=1 // pred_fallthru
      _
    // Predicated region
    $region46: #{tpu_custom_call.1} parent=1 // pred_check
      _
    $region47: #{tpu_custom_call.1} parent=1 // pred_check_branch
      %45 = sbr.rel (0) target = $region49
    $region48: #{tpu_custom_call.1} parent=1 // pred_region
      _
    $region49: #{tpu_custom_call.1} parent=1 // pred_fallthru
      _
    // Predicated region
    $region50: #{tpu_custom_call.1} parent=1 // pred_check
      _
    $region51: #{tpu_custom_call.1} parent=1 // pred_check_branch
      %47 = sbr.rel (0) target = $region53
    $region52: #{tpu_custom_call.1} parent=1 // pred_region
      _
    $region53: #{tpu_custom_call.1} parent=1 // pred_fallthru
      _
    // Predicated region
    $region54: #{tpu_custom_call.1} parent=1 // pred_check
      _
    $region55: #{tpu_custom_call.1} parent=1 // pred_check_branch
      %49 = sbr.rel (0) target = $region57
    $region56: #{tpu_custom_call.1} parent=1 // pred_region
      _
    $region57: #{tpu_custom_call.1} parent=1 // pred_fallthru
      _
    // Predicated region
    $region58: #{tpu_custom_call.1} parent=1 // pred_check
      _
    $region59: #{tpu_custom_call.1} parent=1 // pred_check_branch
      %51 = sbr.rel (0) target = $region61
    $region60: #{tpu_custom_call.1} parent=1 // pred_region
      _
    $region61: #{tpu_custom_call.1} parent=1 // pred_fallthru
      _
    // Predicated region
    $region62: #{tpu_custom_call.1} parent=1 // pred_check
      _
    $region63: #{tpu_custom_call.1} parent=1 // pred_check_branch
      %53 = sbr.rel (0) target = $region65
    $region64: #{tpu_custom_call.1} parent=1 // pred_region
      _
    $region65: #{tpu_custom_call.1} parent=1 // pred_fallthru
      _
    %v54 = vld [vmem:[%s0] sm:$0xff]
    %v55 = vld [vmem:[%s0 + $0x8] sm:$0xff]
    %v56 = vld [vmem:[%s0 + $0x10] sm:$0xff]
    %v57 = vld [vmem:[%s0 + $0x18] sm:$0xff]
    %v58 = vld [vmem:[%s0 + $0x20] sm:$0xff]
    %v59 = vld [vmem:[%s0 + $0x28] sm:$0xff]
    %v60 = vld [vmem:[%s0 + $0x30] sm:$0xff]
    %v61 = vld [vmem:[%s0 + $0x38] sm:$0xff]
    %v62 = vld [vmem:[%s0 + $0x40] sm:$0xff]
    %v63 = vld [vmem:[%s0 + $0x48] sm:$0xff]
    %v64 = vld [vmem:[%s0 + $0x50] sm:$0xff]
    %v65 = vld [vmem:[%s0 + $0x58] sm:$0xff]
    %v66 = vld [vmem:[%s0 + $0x60] sm:$0xff]
    %v67 = vld [vmem:[%s1] sm:$0xff]
    %v68 = vld [vmem:[%s1 + $0x8] sm:$0xff]
    %v69 = vld [vmem:[%s2] sm:$0x1]
    %v71 = vlaneseq
    %v72 = vshrl.u32 %v71, 7
    %v73 = vsub.s32 0, %v72
    %v74 = vrot.slane %v69, %v73
    %vm76 = vcmask 130048
    %v78 = vsel %vm76, %v54, 0
    %v81 = vsel %vm76, %v55, 0
    %v84 = vsel %vm76, %v56, 0
    %v87 = vsel %vm76, %v57, 0
    %v90 = vsel %vm76, %v58, 0
    %v93 = vsel %vm76, %v59, 0
    %v96 = vsel %vm76, %v60, 0
    %v99 = vsel %vm76, %v61, 0
    %v102 = vsel %vm76, %v62, 0
    %v105 = vsel %vm76, %v63, 0
    %v108 = vsel %vm76, %v64, 0
    %v111 = vsel %vm76, %v65, 0
    %v114 = vsel %vm76, %v66, 0
    %116 = vmatprep.subr.mxu0 0.0
    %117 = vmatpush1.msra.mxu0 %v67
    %118 = vmatprep.subr.mxu0 0.0
    %119 = vmatpush1.msra.mxu0 %v68
    %120 = vmatprep.subr.mxu0 0.0
    %121 = vmatpush1.msra.mxu0 0.0
    %122 = vmatprep.subr.mxu0 0.0
    %123 = vmatpush1.msra.mxu0 0.0
    %124 = vmatprep.subr.mxu0 0.0
    %125 = vmatpush1.msra.mxu0 0.0
    %126 = vmatprep.subr.mxu0 0.0
    %127 = vmatpush1.msra.mxu0 0.0
    %128 = vmatprep.subr.mxu0 0.0
    %129 = vmatpush1.msra.mxu0 0.0
    %130 = vmatprep.subr.mxu0 0.0
    %131 = vmatpush1.msra.mxu0 0.0
    %132 = vmatprep.subr.mxu0 0.0
    %133 = vmatpush1.msra.mxu0 0.0
    %134 = vmatprep.subr.mxu0 0.0
    %135 = vmatpush1.msra.mxu0 0.0
    %136 = vmatprep.subr.mxu0 0.0
    %137 = vmatpush1.msra.mxu0 0.0
    %138 = vmatprep.subr.mxu0 0.0
    %139 = vmatpush1.msra.mxu0 0.0
    %140 = vmatprep.subr.mxu0 0.0
    %141 = vmatpush1.msra.mxu0 0.0
    %142 = vmatprep.subr.mxu0 0.0
    %143 = vmatpush1.msra.mxu0 0.0
    %144 = vmatprep.subr.mxu0 0.0
    %145 = vmatpush1.msra.mxu0 0.0
    %146 = vmatprep.subr.mxu0 0.0
    %147 = vmatpush1.msra.mxu0 0.0
    %148 = vmatprep.subr.mxu0 0.0
    %149 = vmatpush1.msra.mxu0 0.0
    %150 = vmatprep.subr.mxu0 0.0
    %151 = vmatpush1.msra.mxu0 0.0
    %152 = vmatprep.subr.mxu0 0.0
    %153 = vmatpush1.msra.mxu0 0.0
    %154 = vmatprep.subr.mxu0 0.0
    %155 = vmatpush1.msra.mxu0 0.0
    %156 = vmatprep.subr.mxu0 0.0
    %157 = vmatpush1.msra.mxu0 0.0
    %158 = vmatprep.subr.mxu0 0.0
    %159 = vmatpush1.msra.mxu0 0.0
    %160 = vmatprep.subr.mxu0 0.0
    %161 = vmatpush1.msra.mxu0 0.0
    %162 = vmatprep.subr.mxu0 0.0
    %163 = vmatpush1.msra.mxu0 0.0
    %164 = vmatprep.subr.mxu0 0.0
    %165 = vmatpush1.msra.mxu0 0.0
    %166 = vmatprep.subr.mxu0 0.0
    %167 = vmatpush1.msra.mxu0 0.0
    %168 = vmatprep.subr.mxu0 0.0
    %169 = vmatpush1.msra.mxu0 0.0
    %170 = vmatprep.subr.mxu0 0.0
    %171 = vmatpush1.msra.mxu0 0.0
    %172 = vmatprep.subr.mxu0 0.0
    %173 = vmatpush1.msra.mxu0 0.0
    %174 = vmatprep.subr.mxu0 0.0
    %175 = vmatpush1.msra.mxu0 0.0
    %176 = vmatprep.subr.mxu0 0.0
    %177 = vmatpush1.msra.mxu0 0.0
    %178 = vmatprep.subr.mxu0 0.0
    %179 = vmatpush1.msra.mxu0 0.0
    %180 = vmatprep.mubr.f32.mxu0 0.0
    %181 = vmatmul.mubr.f32.gmra.mrb[0].mxu0 %v78
    %v182 = vpop.f32.mrb[0].mxu0
    %v183 = vadd.f32 %v74, %v182
    %v184 = vpop.f32.mrb[0].mxu0
    %185 = vmatprep.mubr.f32.mxu0 0.0
    %186 = vmatmul.mubr.f32.gmra.mrb[0].mxu0 %v81
    %v187 = vpop.f32.mrb[0].mxu0
    %v188 = vadd.f32 %v74, %v187
    %v189 = vpop.f32.mrb[0].mxu0
    %190 = vmatprep.mubr.f32.mxu0 0.0
    %191 = vmatmul.mubr.f32.gmra.mrb[0].mxu0 %v84
    %v192 = vpop.f32.mrb[0].mxu0
    %v193 = vadd.f32 %v74, %v192
    %v194 = vpop.f32.mrb[0].mxu0
    %195 = vmatprep.mubr.f32.mxu0 0.0
    %196 = vmatmul.mubr.f32.gmra.mrb[0].mxu0 %v87
    %v197 = vpop.f32.mrb[0].mxu0
    %v198 = vadd.f32 %v74, %v197
    %v199 = vpop.f32.mrb[0].mxu0
    %200 = vmatprep.mubr.f32.mxu0 0.0
    %201 = vmatmul.mubr.f32.gmra.mrb[0].mxu0 %v90
    %v202 = vpop.f32.mrb[0].mxu0
    %v203 = vadd.f32 %v74, %v202
    %v204 = vpop.f32.mrb[0].mxu0
    %205 = vmatprep.mubr.f32.mxu0 0.0
    %206 = vmatmul.mubr.f32.gmra.mrb[0].mxu0 %v93
    %v207 = vpop.f32.mrb[0].mxu0
    %v208 = vadd.f32 %v74, %v207
    %v209 = vpop.f32.mrb[0].mxu0
    %210 = vmatprep.mubr.f32.mxu0 0.0
    %211 = vmatmul.mubr.f32.gmra.mrb[0].mxu0 %v96
    %v212 = vpop.f32.mrb[0].mxu0
    %v213 = vadd.f32 %v74, %v212
    %v214 = vpop.f32.mrb[0].mxu0
    %215 = vmatprep.mubr.f32.mxu0 0.0
    %216 = vmatmul.mubr.f32.gmra.mrb[0].mxu0 %v99
    %v217 = vpop.f32.mrb[0].mxu0
    %v218 = vadd.f32 %v74, %v217
    %v219 = vpop.f32.mrb[0].mxu0
    %220 = vmatprep.mubr.f32.mxu0 0.0
    %221 = vmatmul.mubr.f32.gmra.mrb[0].mxu0 %v102
    %v222 = vpop.f32.mrb[0].mxu0
    %v223 = vadd.f32 %v74, %v222
    %v224 = vpop.f32.mrb[0].mxu0
    %225 = vmatprep.mubr.f32.mxu0 0.0
    %226 = vmatmul.mubr.f32.gmra.mrb[0].mxu0 %v105
    %v227 = vpop.f32.mrb[0].mxu0
    %v228 = vadd.f32 %v74, %v227
    %v229 = vpop.f32.mrb[0].mxu0
    %230 = vmatprep.mubr.f32.mxu0 0.0
    %231 = vmatmul.mubr.f32.gmra.mrb[0].mxu0 %v108
    %v232 = vpop.f32.mrb[0].mxu0
    %v233 = vadd.f32 %v74, %v232
    %v234 = vpop.f32.mrb[0].mxu0
    %235 = vmatprep.mubr.f32.mxu0 0.0
    %236 = vmatmul.mubr.f32.gmra.mrb[0].mxu0 %v111
    %v237 = vpop.f32.mrb[0].mxu0
    %v238 = vadd.f32 %v74, %v237
    %v239 = vpop.f32.mrb[0].mxu0
    %240 = vmatprep.mubr.f32.mxu0 0.0
    %241 = vmatmul.mubr.f32.gmra.mrb[0].mxu0 %v114
    %v242 = vpop.f32.mrb[0].mxu0
    %v243 = vadd.f32 %v74, %v242
    %v244 = vpop.f32.mrb[0].mxu0
    %245 = vdwg.mxu0
    %v246 = vmax.f32 %v183, 0.0
    %v247 = vmax.f32 %v188, 0.0
    %v248 = vmax.f32 %v193, 0.0
    %v249 = vmax.f32 %v198, 0.0
    %v250 = vmax.f32 %v203, 0.0
    %v251 = vmax.f32 %v208, 0.0
    %v252 = vmax.f32 %v213, 0.0
    %v253 = vmax.f32 %v218, 0.0
    %v254 = vmax.f32 %v223, 0.0
    %v255 = vmax.f32 %v228, 0.0
    %v256 = vmax.f32 %v233, 0.0
    %v257 = vmax.f32 %v238, 0.0
    %v258 = vmax.f32 %v243, 0.0
    %v259 = vand.u32 2147483647, %v183
    %v260 = vand.u32 2147483647, %v188
    %v261 = vand.u32 2147483647, %v193
    %v262 = vand.u32 2147483647, %v198
    %v263 = vand.u32 2147483647, %v203
    %v264 = vand.u32 2147483647, %v208
    %v265 = vand.u32 2147483647, %v213
    %v266 = vand.u32 2147483647, %v218
    %v267 = vand.u32 2147483647, %v223
    %v268 = vand.u32 2147483647, %v228
    %v269 = vand.u32 2147483647, %v233
    %v270 = vand.u32 2147483647, %v238
    %v271 = vand.u32 2147483647, %v243
    %v272 = vsub.f32 0.0, %v259
    %v273 = vsub.f32 0.0, %v260
    %v274 = vsub.f32 0.0, %v261
    %v275 = vsub.f32 0.0, %v262
    %v276 = vsub.f32 0.0, %v263
    %v277 = vsub.f32 0.0, %v264
    %v278 = vsub.f32 0.0, %v265
    %v279 = vsub.f32 0.0, %v266
    %v280 = vsub.f32 0.0, %v267
    %v281 = vsub.f32 0.0, %v268
    %v282 = vsub.f32 0.0, %v269
    %v283 = vsub.f32 0.0, %v270
    %v284 = vsub.f32 0.0, %v271
    %v285 = vmul.f32 %v272, 1.442695
    %v286 = vpow.pop %v285
    %v287 = vmul.f32 %v273, 1.442695
    %v288 = vpow.pop %v287
    %v289 = vmul.f32 %v274, 1.442695
    %v290 = vpow.pop %v289
    %v291 = vmul.f32 %v275, 1.442695
    %v292 = vpow.pop %v291
    %v293 = vmul.f32 %v276, 1.442695
    %v294 = vpow.pop %v293
    %v295 = vmul.f32 %v277, 1.442695
    %v296 = vpow.pop %v295
    %v297 = vmul.f32 %v278, 1.442695
    %v298 = vpow.pop %v297
    %v299 = vmul.f32 %v279, 1.442695
    %v300 = vpow.pop %v299
    %v301 = vmul.f32 %v280, 1.442695
    %v302 = vpow.pop %v301
    %v303 = vmul.f32 %v281, 1.442695
    %v304 = vpow.pop %v303
    %v305 = vmul.f32 %v282, 1.442695
    %v306 = vpow.pop %v305
    %v307 = vmul.f32 %v283, 1.442695
    %v308 = vpow.pop %v307
    %v309 = vmul.f32 %v284, 1.442695
    %v310 = vpow.pop %v309
    %v311 = vadd.f32 %v286, 1.0
    %v312 = vlog2.pop %v311
    %v313 = vmul.f32 %v312, 0.6931472
    %v314 = vmul.f32 -0.5, %v286
    %v315 = vadd.f32 %v314, 1.0
    %v316 = vmul.f32 %v315, %v286
    %v317 = vand.u32 2147483647, %v286
    %vm318 = vcmp.lt.f32.partialorder %v317, 0.0004427343
    %v319 = vsel %vm318, %v316, %v313
    %v320 = vadd.f32 %v288, 1.0
    %v321 = vlog2.pop %v320
    %v322 = vmul.f32 %v321, 0.6931472
    %v323 = vmul.f32 -0.5, %v288
    %v324 = vadd.f32 %v323, 1.0
    %v325 = vmul.f32 %v324, %v288
    %v326 = vand.u32 2147483647, %v288
    %vm327 = vcmp.lt.f32.partialorder %v326, 0.0004427343
    %v328 = vsel %vm327, %v325, %v322
    %v329 = vadd.f32 %v290, 1.0
    %v330 = vlog2.pop %v329
    %v331 = vmul.f32 %v330, 0.6931472
    %v332 = vmul.f32 -0.5, %v290
    %v333 = vadd.f32 %v332, 1.0
    %v334 = vmul.f32 %v333, %v290
    %v335 = vand.u32 2147483647, %v290
    %vm336 = vcmp.lt.f32.partialorder %v335, 0.0004427343
    %v337 = vsel %vm336, %v334, %v331
    %v338 = vadd.f32 %v292, 1.0
    %v339 = vlog2.pop %v338
    %v340 = vmul.f32 %v339, 0.6931472
    %v341 = vmul.f32 -0.5, %v292
    %v342 = vadd.f32 %v341, 1.0
    %v343 = vmul.f32 %v342, %v292
    %v344 = vand.u32 2147483647, %v292
    %vm345 = vcmp.lt.f32.partialorder %v344, 0.0004427343
    %v346 = vsel %vm345, %v343, %v340
    %v347 = vadd.f32 %v294, 1.0
    %v348 = vlog2.pop %v347
    %v349 = vmul.f32 %v348, 0.6931472
    %v350 = vmul.f32 -0.5, %v294
    %v351 = vadd.f32 %v350, 1.0
    %v352 = vmul.f32 %v351, %v294
    %v353 = vand.u32 2147483647, %v294
    %vm354 = vcmp.lt.f32.partialorder %v353, 0.0004427343
    %v355 = vsel %vm354, %v352, %v349
    %v356 = vadd.f32 %v296, 1.0
    %v357 = vlog2.pop %v356
    %v358 = vmul.f32 %v357, 0.6931472
    %v359 = vmul.f32 -0.5, %v296
    %v360 = vadd.f32 %v359, 1.0
    %v361 = vmul.f32 %v360, %v296
    %v362 = vand.u32 2147483647, %v296
    %vm363 = vcmp.lt.f32.partialorder %v362, 0.0004427343
    %v364 = vsel %vm363, %v361, %v358
    %v365 = vadd.f32 %v298, 1.0
    %v366 = vlog2.pop %v365
    %v367 = vmul.f32 %v366, 0.6931472
    %v368 = vmul.f32 -0.5, %v298
    %v369 = vadd.f32 %v368, 1.0
    %v370 = vmul.f32 %v369, %v298
    %v371 = vand.u32 2147483647, %v298
    %vm372 = vcmp.lt.f32.partialorder %v371, 0.0004427343
    %v373 = vsel %vm372, %v370, %v367
    %v374 = vadd.f32 %v300, 1.0
    %v375 = vlog2.pop %v374
    %v376 = vmul.f32 %v375, 0.6931472
    %v377 = vmul.f32 -0.5, %v300
    %v378 = vadd.f32 %v377, 1.0
    %v379 = vmul.f32 %v378, %v300
    %v380 = vand.u32 2147483647, %v300
    %vm381 = vcmp.lt.f32.partialorder %v380, 0.0004427343
    %v382 = vsel %vm381, %v379, %v376
    %v383 = vadd.f32 %v302, 1.0
    %v384 = vlog2.pop %v383
    %v385 = vmul.f32 %v384, 0.6931472
    %v386 = vmul.f32 -0.5, %v302
    %v387 = vadd.f32 %v386, 1.0
    %v388 = vmul.f32 %v387, %v302
    %v389 = vand.u32 2147483647, %v302
    %vm390 = vcmp.lt.f32.partialorder %v389, 0.0004427343
    %v391 = vsel %vm390, %v388, %v385
    %v392 = vadd.f32 %v304, 1.0
    %v393 = vlog2.pop %v392
    %v394 = vmul.f32 %v393, 0.6931472
    %v395 = vmul.f32 -0.5, %v304
    %v396 = vadd.f32 %v395, 1.0
    %v397 = vmul.f32 %v396, %v304
    %v398 = vand.u32 2147483647, %v304
    %vm399 = vcmp.lt.f32.partialorder %v398, 0.0004427343
    %v400 = vsel %vm399, %v397, %v394
    %v401 = vadd.f32 %v306, 1.0
    %v402 = vlog2.pop %v401
    %v403 = vmul.f32 %v402, 0.6931472
    %v404 = vmul.f32 -0.5, %v306
    %v405 = vadd.f32 %v404, 1.0
    %v406 = vmul.f32 %v405, %v306
    %v407 = vand.u32 2147483647, %v306
    %vm408 = vcmp.lt.f32.partialorder %v407, 0.0004427343
    %v409 = vsel %vm408, %v406, %v403
    %v410 = vadd.f32 %v308, 1.0
    %v411 = vlog2.pop %v410
    %v412 = vmul.f32 %v411, 0.6931472
    %v413 = vmul.f32 -0.5, %v308
    %v414 = vadd.f32 %v413, 1.0
    %v415 = vmul.f32 %v414, %v308
    %v416 = vand.u32 2147483647, %v308
    %vm417 = vcmp.lt.f32.partialorder %v416, 0.0004427343
    %v418 = vsel %vm417, %v415, %v412
    %v419 = vadd.f32 %v310, 1.0
    %v420 = vlog2.pop %v419
    %v421 = vmul.f32 %v420, 0.6931472
    %v422 = vmul.f32 -0.5, %v310
    %v423 = vadd.f32 %v422, 1.0
    %v424 = vmul.f32 %v423, %v310
    %v425 = vand.u32 2147483647, %v310
    %vm426 = vcmp.lt.f32.partialorder %v425, 0.0004427343
    %v427 = vsel %vm426, %v424, %v421
    %v428 = vadd.f32 %v246, %v319
    %v429 = vadd.f32 %v247, %v328
    %v430 = vadd.f32 %v248, %v337
    %v431 = vadd.f32 %v249, %v346
    %v432 = vadd.f32 %v250, %v355
    %v433 = vadd.f32 %v251, %v364
    %v434 = vadd.f32 %v252, %v373
    %v435 = vadd.f32 %v253, %v382
    %v436 = vadd.f32 %v254, %v391
    %v437 = vadd.f32 %v255, %v400
    %v438 = vadd.f32 %v256, %v409
    %v439 = vadd.f32 %v257, %v418
    %v440 = vadd.f32 %v258, %v427
    %v441 = vld [vmem:[%s3] sm:$0xff]
    %v442 = vld [vmem:[%s3 + $0x8] sm:$0xff]
    %v443 = vld [vmem:[%s3 + $0x10] sm:$0xff]
    %v444 = vld [vmem:[%s3 + $0x18] sm:$0xff]
    %v445 = vld [vmem:[%s3 + $0x20] sm:$0xff]
    %v446 = vld [vmem:[%s3 + $0x28] sm:$0xff]
    %v447 = vld [vmem:[%s3 + $0x30] sm:$0xff]
    %v448 = vld [vmem:[%s3 + $0x38] sm:$0xff]
    %v449 = vld [vmem:[%s3 + $0x40] sm:$0xff]
    %v450 = vld [vmem:[%s3 + $0x48] sm:$0xff]
    %v451 = vld [vmem:[%s3 + $0x50] sm:$0xff]
    %v452 = vld [vmem:[%s3 + $0x58] sm:$0xff]
    %v453 = vld [vmem:[%s4] sm:$0x1]
    %v455 = vlaneseq
    %v456 = vshrl.u32 %v455, 7
    %v457 = vsub.s32 0, %v456
    %v458 = vrot.slane %v453, %v457
    %vm460 = vcmask 785408
    %v462 = vsel %vm460, %v428, 0
    %v465 = vsel %vm460, %v429, 0
    %v468 = vsel %vm460, %v430, 0
    %v471 = vsel %vm460, %v431, 0
    %v474 = vsel %vm460, %v432, 0
    %v477 = vsel %vm460, %v433, 0
    %v480 = vsel %vm460, %v434, 0
    %v483 = vsel %vm460, %v435, 0
    %v486 = vsel %vm460, %v436, 0
    %v489 = vsel %vm460, %v437, 0
    %v492 = vsel %vm460, %v438, 0
    %v495 = vsel %vm460, %v439, 0
    %v498 = vsel %vm460, %v440, 0
    %500 = vmatprep.subr.mxu0 0.0
    %501 = vmatpush1.msra.mxu0 %v441
    %502 = vmatprep.subr.mxu0 0.0
    %503 = vmatpush1.msra.mxu0 %v442
    %504 = vmatprep.subr.mxu0 0.0
    %505 = vmatpush1.msra.mxu0 %v443
    %506 = vmatprep.subr.mxu0 0.0
    %507 = vmatpush1.msra.mxu0 %v444
    %508 = vmatprep.subr.mxu0 0.0
    %509 = vmatpush1.msra.mxu0 %v445
    %510 = vmatprep.subr.mxu0 0.0
    %511 = vmatpush1.msra.mxu0 %v446
    %512 = vmatprep.subr.mxu0 0.0
    %513 = vmatpush1.msra.mxu0 %v447
    %514 = vmatprep.subr.mxu0 0.0
    %515 = vmatpush1.msra.mxu0 %v448
    %516 = vmatprep.subr.mxu0 0.0
    %517 = vmatpush1.msra.mxu0 %v449
    %518 = vmatprep.subr.mxu0 0.0
    %519 = vmatpush1.msra.mxu0 %v450
    %520 = vmatprep.subr.mxu0 0.0
    %521 = vmatpush1.msra.mxu0 %v451
    %522 = vmatprep.subr.mxu0 0.0
    %523 = vmatpush1.msra.mxu0 %v452
    %524 = vmatprep.subr.mxu0 0.0
    %525 = vmatpush1.msra.mxu0 0.0
    %526 = vmatprep.subr.mxu0 0.0
    %527 = vmatpush1.msra.mxu0 0.0
    %528 = vmatprep.subr.mxu0 0.0
    %529 = vmatpush1.msra.mxu0 0.0
    %530 = vmatprep.subr.mxu0 0.0
    %531 = vmatpush1.msra.mxu0 0.0
    %532 = vmatprep.subr.mxu0 0.0
    %533 = vmatpush1.msra.mxu0 0.0
    %534 = vmatprep.subr.mxu0 0.0
    %535 = vmatpush1.msra.mxu0 0.0
    %536 = vmatprep.subr.mxu0 0.0
    %537 = vmatpush1.msra.mxu0 0.0
    %538 = vmatprep.subr.mxu0 0.0
    %539 = vmatpush1.msra.mxu0 0.0
    %540 = vmatprep.subr.mxu0 0.0
    %541 = vmatpush1.msra.mxu0 0.0
    %542 = vmatprep.subr.mxu0 0.0
    %543 = vmatpush1.msra.mxu0 0.0
    %544 = vmatprep.subr.mxu0 0.0
    %545 = vmatpush1.msra.mxu0 0.0
    %546 = vmatprep.subr.mxu0 0.0
    %547 = vmatpush1.msra.mxu0 0.0
    %548 = vmatprep.subr.mxu0 0.0
    %549 = vmatpush1.msra.mxu0 0.0
    %550 = vmatprep.subr.mxu0 0.0
    %551 = vmatpush1.msra.mxu0 0.0
    %552 = vmatprep.subr.mxu0 0.0
    %553 = vmatpush1.msra.mxu0 0.0
    %554 = vmatprep.subr.mxu0 0.0
    %555 = vmatpush1.msra.mxu0 0.0
    %556 = vmatprep.subr.mxu0 0.0
    %557 = vmatpush1.msra.mxu0 0.0
    %558 = vmatprep.subr.mxu0 0.0
    %559 = vmatpush1.msra.mxu0 0.0
    %560 = vmatprep.subr.mxu0 0.0
    %561 = vmatpush1.msra.mxu0 0.0
    %562 = vmatprep.subr.mxu0 0.0
    %563 = vmatpush1.msra.mxu0 0.0
    %564 = vmatprep.mubr.f32.mxu0 0.0
    %565 = vmatmul.mubr.f32.gmra.mrb[0].mxu0 %v462
    %v566 = vpop.f32.mrb[0].mxu0
    %v567 = vadd.f32 %v458, %v566
    %v568 = vpop.f32.mrb[0].mxu0
    %569 = vmatprep.mubr.f32.mxu0 0.0
    %570 = vmatmul.mubr.f32.gmra.mrb[0].mxu0 %v465
    %v571 = vpop.f32.mrb[0].mxu0
    %v572 = vadd.f32 %v458, %v571
    %v573 = vpop.f32.mrb[0].mxu0
    %574 = vmatprep.mubr.f32.mxu0 0.0
    %575 = vmatmul.mubr.f32.gmra.mrb[0].mxu0 %v468
    %v576 = vpop.f32.mrb[0].mxu0
    %v577 = vadd.f32 %v458, %v576
    %v578 = vpop.f32.mrb[0].mxu0
    %579 = vmatprep.mubr.f32.mxu0 0.0
    %580 = vmatmul.mubr.f32.gmra.mrb[0].mxu0 %v471
    %v581 = vpop.f32.mrb[0].mxu0
    %v582 = vadd.f32 %v458, %v581
    %v583 = vpop.f32.mrb[0].mxu0
    %584 = vmatprep.mubr.f32.mxu0 0.0
    %585 = vmatmul.mubr.f32.gmra.mrb[0].mxu0 %v474
    %v586 = vpop.f32.mrb[0].mxu0
    %v587 = vadd.f32 %v458, %v586
    %v588 = vpop.f32.mrb[0].mxu0
    %589 = vmatprep.mubr.f32.mxu0 0.0
    %590 = vmatmul.mubr.f32.gmra.mrb[0].mxu0 %v477
    %v591 = vpop.f32.mrb[0].mxu0
    %v592 = vadd.f32 %v458, %v591
    %v593 = vpop.f32.mrb[0].mxu0
    %594 = vmatprep.mubr.f32.mxu0 0.0
    %595 = vmatmul.mubr.f32.gmra.mrb[0].mxu0 %v480
    %v596 = vpop.f32.mrb[0].mxu0
    %v597 = vadd.f32 %v458, %v596
    %v598 = vpop.f32.mrb[0].mxu0
    %599 = vmatprep.mubr.f32.mxu0 0.0
    %600 = vmatmul.mubr.f32.gmra.mrb[0].mxu0 %v483
    %v601 = vpop.f32.mrb[0].mxu0
    %v602 = vadd.f32 %v458, %v601
    %v603 = vpop.f32.mrb[0].mxu0
    %604 = vmatprep.mubr.f32.mxu0 0.0
    %605 = vmatmul.mubr.f32.gmra.mrb[0].mxu0 %v486
    %v606 = vpop.f32.mrb[0].mxu0
    %v607 = vadd.f32 %v458, %v606
    %v608 = vpop.f32.mrb[0].mxu0
    %609 = vmatprep.mubr.f32.mxu0 0.0
    %610 = vmatmul.mubr.f32.gmra.mrb[0].mxu0 %v489
    %v611 = vpop.f32.mrb[0].mxu0
    %v612 = vadd.f32 %v458, %v611
    %v613 = vpop.f32.mrb[0].mxu0
    %614 = vmatprep.mubr.f32.mxu0 0.0
    %615 = vmatmul.mubr.f32.gmra.mrb[0].mxu0 %v492
    %v616 = vpop.f32.mrb[0].mxu0
    %v617 = vadd.f32 %v458, %v616
    %v618 = vpop.f32.mrb[0].mxu0
    %619 = vmatprep.mubr.f32.mxu0 0.0
    %620 = vmatmul.mubr.f32.gmra.mrb[0].mxu0 %v495
    %v621 = vpop.f32.mrb[0].mxu0
    %v622 = vadd.f32 %v458, %v621
    %v623 = vpop.f32.mrb[0].mxu0
    %624 = vmatprep.mubr.f32.mxu0 0.0
    %625 = vmatmul.mubr.f32.gmra.mrb[0].mxu0 %v498
    %v626 = vpop.f32.mrb[0].mxu0
    %v627 = vadd.f32 %v458, %v626
    %v628 = vpop.f32.mrb[0].mxu0
    %629 = vdwg.mxu0
    %v630 = vmax.f32 %v567, 0.0
    %v631 = vmax.f32 %v572, 0.0
    %v632 = vmax.f32 %v577, 0.0
    %v633 = vmax.f32 %v582, 0.0
    %v634 = vmax.f32 %v587, 0.0
    %v635 = vmax.f32 %v592, 0.0
    %v636 = vmax.f32 %v597, 0.0
    %v637 = vmax.f32 %v602, 0.0
    %v638 = vmax.f32 %v607, 0.0
    %v639 = vmax.f32 %v612, 0.0
    %v640 = vmax.f32 %v617, 0.0
    %v641 = vmax.f32 %v622, 0.0
    %v642 = vmax.f32 %v627, 0.0
    %v643 = vand.u32 2147483647, %v567
    %v644 = vand.u32 2147483647, %v572
    %v645 = vand.u32 2147483647, %v577
    %v646 = vand.u32 2147483647, %v582
    %v647 = vand.u32 2147483647, %v587
    %v648 = vand.u32 2147483647, %v592
    %v649 = vand.u32 2147483647, %v597
    %v650 = vand.u32 2147483647, %v602
    %v651 = vand.u32 2147483647, %v607
    %v652 = vand.u32 2147483647, %v612
    %v653 = vand.u32 2147483647, %v617
    %v654 = vand.u32 2147483647, %v622
    %v655 = vand.u32 2147483647, %v627
    %v656 = vsub.f32 0.0, %v643
    %v657 = vsub.f32 0.0, %v644
    %v658 = vsub.f32 0.0, %v645
    %v659 = vsub.f32 0.0, %v646
    %v660 = vsub.f32 0.0, %v647
    %v661 = vsub.f32 0.0, %v648
    %v662 = vsub.f32 0.0, %v649
    %v663 = vsub.f32 0.0, %v650
    %v664 = vsub.f32 0.0, %v651
    %v665 = vsub.f32 0.0, %v652
    %v666 = vsub.f32 0.0, %v653
    %v667 = vsub.f32 0.0, %v654
    %v668 = vsub.f32 0.0, %v655
    %v669 = vmul.f32 %v656, 1.442695
    %v670 = vpow.pop %v669
    %v671 = vmul.f32 %v657, 1.442695
    %v672 = vpow.pop %v671
    %v673 = vmul.f32 %v658, 1.442695
    %v674 = vpow.pop %v673
    %v675 = vmul.f32 %v659, 1.442695
    %v676 = vpow.pop %v675
    %v677 = vmul.f32 %v660, 1.442695
    %v678 = vpow.pop %v677
    %v679 = vmul.f32 %v661, 1.442695
    %v680 = vpow.pop %v679
    %v681 = vmul.f32 %v662, 1.442695
    %v682 = vpow.pop %v681
    %v683 = vmul.f32 %v663, 1.442695
    %v684 = vpow.pop %v683
    %v685 = vmul.f32 %v664, 1.442695
    %v686 = vpow.pop %v685
    %v687 = vmul.f32 %v665, 1.442695
    %v688 = vpow.pop %v687
    %v689 = vmul.f32 %v666, 1.442695
    %v690 = vpow.pop %v689
    %v691 = vmul.f32 %v667, 1.442695
    %v692 = vpow.pop %v691
    %v693 = vmul.f32 %v668, 1.442695
    %v694 = vpow.pop %v693
    %v695 = vadd.f32 %v670, 1.0
    %v696 = vlog2.pop %v695
    %v697 = vmul.f32 %v696, 0.6931472
    %v698 = vmul.f32 -0.5, %v670
    %v699 = vadd.f32 %v698, 1.0
    %v700 = vmul.f32 %v699, %v670
    %v701 = vand.u32 2147483647, %v670
    %vm702 = vcmp.lt.f32.partialorder %v701, 0.0004427343
    %v703 = vsel %vm702, %v700, %v697
    %v704 = vadd.f32 %v672, 1.0
    %v705 = vlog2.pop %v704
    %v706 = vmul.f32 %v705, 0.6931472
    %v707 = vmul.f32 -0.5, %v672
    %v708 = vadd.f32 %v707, 1.0
    %v709 = vmul.f32 %v708, %v672
    %v710 = vand.u32 2147483647, %v672
    %vm711 = vcmp.lt.f32.partialorder %v710, 0.0004427343
    %v712 = vsel %vm711, %v709, %v706
    %v713 = vadd.f32 %v674, 1.0
    %v714 = vlog2.pop %v713
    %v715 = vmul.f32 %v714, 0.6931472
    %v716 = vmul.f32 -0.5, %v674
    %v717 = vadd.f32 %v716, 1.0
    %v718 = vmul.f32 %v717, %v674
    %v719 = vand.u32 2147483647, %v674
    %vm720 = vcmp.lt.f32.partialorder %v719, 0.0004427343
    %v721 = vsel %vm720, %v718, %v715
    %v722 = vadd.f32 %v676, 1.0
    %v723 = vlog2.pop %v722
    %v724 = vmul.f32 %v723, 0.6931472
    %v725 = vmul.f32 -0.5, %v676
    %v726 = vadd.f32 %v725, 1.0
    %v727 = vmul.f32 %v726, %v676
    %v728 = vand.u32 2147483647, %v676
    %vm729 = vcmp.lt.f32.partialorder %v728, 0.0004427343
    %v730 = vsel %vm729, %v727, %v724
    %v731 = vadd.f32 %v678, 1.0
    %v732 = vlog2.pop %v731
    %v733 = vmul.f32 %v732, 0.6931472
    %v734 = vmul.f32 -0.5, %v678
    %v735 = vadd.f32 %v734, 1.0
    %v736 = vmul.f32 %v735, %v678
    %v737 = vand.u32 2147483647, %v678
    %vm738 = vcmp.lt.f32.partialorder %v737, 0.0004427343
    %v739 = vsel %vm738, %v736, %v733
    %v740 = vadd.f32 %v680, 1.0
    %v741 = vlog2.pop %v740
    %v742 = vmul.f32 %v741, 0.6931472
    %v743 = vmul.f32 -0.5, %v680
    %v744 = vadd.f32 %v743, 1.0
    %v745 = vmul.f32 %v744, %v680
    %v746 = vand.u32 2147483647, %v680
    %vm747 = vcmp.lt.f32.partialorder %v746, 0.0004427343
    %v748 = vsel %vm747, %v745, %v742
    %v749 = vadd.f32 %v682, 1.0
    %v750 = vlog2.pop %v749
    %v751 = vmul.f32 %v750, 0.6931472
    %v752 = vmul.f32 -0.5, %v682
    %v753 = vadd.f32 %v752, 1.0
    %v754 = vmul.f32 %v753, %v682
    %v755 = vand.u32 2147483647, %v682
    %vm756 = vcmp.lt.f32.partialorder %v755, 0.0004427343
    %v757 = vsel %vm756, %v754, %v751
    %v758 = vadd.f32 %v684, 1.0
    %v759 = vlog2.pop %v758
    %v760 = vmul.f32 %v759, 0.6931472
    %v761 = vmul.f32 -0.5, %v684
    %v762 = vadd.f32 %v761, 1.0
    %v763 = vmul.f32 %v762, %v684
    %v764 = vand.u32 2147483647, %v684
    %vm765 = vcmp.lt.f32.partialorder %v764, 0.0004427343
    %v766 = vsel %vm765, %v763, %v760
    %v767 = vadd.f32 %v686, 1.0
    %v768 = vlog2.pop %v767
    %v769 = vmul.f32 %v768, 0.6931472
    %v770 = vmul.f32 -0.5, %v686
    %v771 = vadd.f32 %v770, 1.0
    %v772 = vmul.f32 %v771, %v686
    %v773 = vand.u32 2147483647, %v686
    %vm774 = vcmp.lt.f32.partialorder %v773, 0.0004427343
    %v775 = vsel %vm774, %v772, %v769
    %v776 = vadd.f32 %v688, 1.0
    %v777 = vlog2.pop %v776
    %v778 = vmul.f32 %v777, 0.6931472
    %v779 = vmul.f32 -0.5, %v688
    %v780 = vadd.f32 %v779, 1.0
    %v781 = vmul.f32 %v780, %v688
    %v782 = vand.u32 2147483647, %v688
    %vm783 = vcmp.lt.f32.partialorder %v782, 0.0004427343
    %v784 = vsel %vm783, %v781, %v778
    %v785 = vadd.f32 %v690, 1.0
    %v786 = vlog2.pop %v785
    %v787 = vmul.f32 %v786, 0.6931472
    %v788 = vmul.f32 -0.5, %v690
    %v789 = vadd.f32 %v788, 1.0
    %v790 = vmul.f32 %v789, %v690
    %v791 = vand.u32 2147483647, %v690
    %vm792 = vcmp.lt.f32.partialorder %v791, 0.0004427343
    %v793 = vsel %vm792, %v790, %v787
    %v794 = vadd.f32 %v692, 1.0
    %v795 = vlog2.pop %v794
    %v796 = vmul.f32 %v795, 0.6931472
    %v797 = vmul.f32 -0.5, %v692
    %v798 = vadd.f32 %v797, 1.0
    %v799 = vmul.f32 %v798, %v692
    %v800 = vand.u32 2147483647, %v692
    %vm801 = vcmp.lt.f32.partialorder %v800, 0.0004427343
    %v802 = vsel %vm801, %v799, %v796
    %v803 = vadd.f32 %v694, 1.0
    %v804 = vlog2.pop %v803
    %v805 = vmul.f32 %v804, 0.6931472
    %v806 = vmul.f32 -0.5, %v694
    %v807 = vadd.f32 %v806, 1.0
    %v808 = vmul.f32 %v807, %v694
    %v809 = vand.u32 2147483647, %v694
    %vm810 = vcmp.lt.f32.partialorder %v809, 0.0004427343
    %v811 = vsel %vm810, %v808, %v805
    %v812 = vadd.f32 %v630, %v703
    %v813 = vadd.f32 %v631, %v712
    %v814 = vadd.f32 %v632, %v721
    %v815 = vadd.f32 %v633, %v730
    %v816 = vadd.f32 %v634, %v739
    %v817 = vadd.f32 %v635, %v748
    %v818 = vadd.f32 %v636, %v757
    %v819 = vadd.f32 %v637, %v766
    %v820 = vadd.f32 %v638, %v775
    %v821 = vadd.f32 %v639, %v784
    %v822 = vadd.f32 %v640, %v793
    %v823 = vadd.f32 %v641, %v802
    %v824 = vadd.f32 %v642, %v811
    %v825 = vld [vmem:[%s5] sm:$0xff]
    %v826 = vld [vmem:[%s5 + $0x8] sm:$0xff]
    %v827 = vld [vmem:[%s5 + $0x10] sm:$0xff]
    %v828 = vld [vmem:[%s5 + $0x18] sm:$0xff]
    %v829 = vld [vmem:[%s5 + $0x20] sm:$0xff]
    %v830 = vld [vmem:[%s5 + $0x28] sm:$0xff]
    %v831 = vld [vmem:[%s5 + $0x30] sm:$0xff]
    %v832 = vld [vmem:[%s5 + $0x38] sm:$0xff]
    %v833 = vld [vmem:[%s5 + $0x40] sm:$0xff]
    %v834 = vld [vmem:[%s5 + $0x48] sm:$0xff]
    %v835 = vld [vmem:[%s5 + $0x50] sm:$0xff]
    %v836 = vld [vmem:[%s5 + $0x58] sm:$0xff]
    %v837 = vld [vmem:[%s6] sm:$0x1]
    %v839 = vlaneseq
    %v840 = vshrl.u32 %v839, 7
    %v841 = vsub.s32 0, %v840
    %v842 = vrot.slane %v837, %v841
    %v845 = vsel %vm460, %v812, 0
    %v848 = vsel %vm460, %v813, 0
    %v851 = vsel %vm460, %v814, 0
    %v854 = vsel %vm460, %v815, 0
    %v857 = vsel %vm460, %v816, 0
    %v860 = vsel %vm460, %v817, 0
    %v863 = vsel %vm460, %v818, 0
    %v866 = vsel %vm460, %v819, 0
    %v869 = vsel %vm460, %v820, 0
    %v872 = vsel %vm460, %v821, 0
    %v875 = vsel %vm460, %v822, 0
    %v878 = vsel %vm460, %v823, 0
    %v881 = vsel %vm460, %v824, 0
    %883 = vmatprep.subr.mxu0 0.0
    %884 = vmatpush1.msra.mxu0 %v825
    %885 = vmatprep.subr.mxu0 0.0
    %886 = vmatpush1.msra.mxu0 %v826
    %887 = vmatprep.subr.mxu0 0.0
    %888 = vmatpush1.msra.mxu0 %v827
    %889 = vmatprep.subr.mxu0 0.0
    %890 = vmatpush1.msra.mxu0 %v828
    %891 = vmatprep.subr.mxu0 0.0
    %892 = vmatpush1.msra.mxu0 %v829
    %893 = vmatprep.subr.mxu0 0.0
    %894 = vmatpush1.msra.mxu0 %v830
    %895 = vmatprep.subr.mxu0 0.0
    %896 = vmatpush1.msra.mxu0 %v831
    %897 = vmatprep.subr.mxu0 0.0
    %898 = vmatpush1.msra.mxu0 %v832
    %899 = vmatprep.subr.mxu0 0.0
    %900 = vmatpush1.msra.mxu0 %v833
    %901 = vmatprep.subr.mxu0 0.0
    %902 = vmatpush1.msra.mxu0 %v834
    %903 = vmatprep.subr.mxu0 0.0
    %904 = vmatpush1.msra.mxu0 %v835
    %905 = vmatprep.subr.mxu0 0.0
    %906 = vmatpush1.msra.mxu0 %v836
    %907 = vmatprep.subr.mxu0 0.0
    %908 = vmatpush1.msra.mxu0 0.0
    %909 = vmatprep.subr.mxu0 0.0
    %910 = vmatpush1.msra.mxu0 0.0
    %911 = vmatprep.subr.mxu0 0.0
    %912 = vmatpush1.msra.mxu0 0.0
    %913 = vmatprep.subr.mxu0 0.0
    %914 = vmatpush1.msra.mxu0 0.0
    %915 = vmatprep.subr.mxu0 0.0
    %916 = vmatpush1.msra.mxu0 0.0
    %917 = vmatprep.subr.mxu0 0.0
    %918 = vmatpush1.msra.mxu0 0.0
    %919 = vmatprep.subr.mxu0 0.0
    %920 = vmatpush1.msra.mxu0 0.0
    %921 = vmatprep.subr.mxu0 0.0
    %922 = vmatpush1.msra.mxu0 0.0
    %923 = vmatprep.subr.mxu0 0.0
    %924 = vmatpush1.msra.mxu0 0.0
    %925 = vmatprep.subr.mxu0 0.0
    %926 = vmatpush1.msra.mxu0 0.0
    %927 = vmatprep.subr.mxu0 0.0
    %928 = vmatpush1.msra.mxu0 0.0
    %929 = vmatprep.subr.mxu0 0.0
    %930 = vmatpush1.msra.mxu0 0.0
    %931 = vmatprep.subr.mxu0 0.0
    %932 = vmatpush1.msra.mxu0 0.0
    %933 = vmatprep.subr.mxu0 0.0
    %934 = vmatpush1.msra.mxu0 0.0
    %935 = vmatprep.subr.mxu0 0.0
    %936 = vmatpush1.msra.mxu0 0.0
    %937 = vmatprep.subr.mxu0 0.0
    %938 = vmatpush1.msra.mxu0 0.0
    %939 = vmatprep.subr.mxu0 0.0
    %940 = vmatpush1.msra.mxu0 0.0
    %941 = vmatprep.subr.mxu0 0.0
    %942 = vmatpush1.msra.mxu0 0.0
    %943 = vmatprep.subr.mxu0 0.0
    %944 = vmatpush1.msra.mxu0 0.0
    %945 = vmatprep.subr.mxu0 0.0
    %946 = vmatpush1.msra.mxu0 0.0
    %947 = vmatprep.mubr.f32.mxu0 0.0
    %948 = vmatmul.mubr.f32.gmra.mrb[0].mxu0 %v845
    %v949 = vpop.f32.mrb[0].mxu0
    %v950 = vadd.f32 %v842, %v949
    %v951 = vpop.f32.mrb[0].mxu0
    %952 = vmatprep.mubr.f32.mxu0 0.0
    %953 = vmatmul.mubr.f32.gmra.mrb[0].mxu0 %v848
    %v954 = vpop.f32.mrb[0].mxu0
    %v955 = vadd.f32 %v842, %v954
    %v956 = vpop.f32.mrb[0].mxu0
    %957 = vmatprep.mubr.f32.mxu0 0.0
    %958 = vmatmul.mubr.f32.gmra.mrb[0].mxu0 %v851
    %v959 = vpop.f32.mrb[0].mxu0
    %v960 = vadd.f32 %v842, %v959
    %v961 = vpop.f32.mrb[0].mxu0
    %962 = vmatprep.mubr.f32.mxu0 0.0
    %963 = vmatmul.mubr.f32.gmra.mrb[0].mxu0 %v854
    %v964 = vpop.f32.mrb[0].mxu0
    %v965 = vadd.f32 %v842, %v964
    %v966 = vpop.f32.mrb[0].mxu0
    %967 = vmatprep.mubr.f32.mxu0 0.0
    %968 = vmatmul.mubr.f32.gmra.mrb[0].mxu0 %v857
    %v969 = vpop.f32.mrb[0].mxu0
    %v970 = vadd.f32 %v842, %v969
    %v971 = vpop.f32.mrb[0].mxu0
    %972 = vmatprep.mubr.f32.mxu0 0.0
    %973 = vmatmul.mubr.f32.gmra.mrb[0].mxu0 %v860
    %v974 = vpop.f32.mrb[0].mxu0
    %v975 = vadd.f32 %v842, %v974
    %v976 = vpop.f32.mrb[0].mxu0
    %977 = vmatprep.mubr.f32.mxu0 0.0
    %978 = vmatmul.mubr.f32.gmra.mrb[0].mxu0 %v863
    %v979 = vpop.f32.mrb[0].mxu0
    %v980 = vadd.f32 %v842, %v979
    %v981 = vpop.f32.mrb[0].mxu0
    %982 = vmatprep.mubr.f32.mxu0 0.0
    %983 = vmatmul.mubr.f32.gmra.mrb[0].mxu0 %v866
    %v984 = vpop.f32.mrb[0].mxu0
    %v985 = vadd.f32 %v842, %v984
    %v986 = vpop.f32.mrb[0].mxu0
    %987 = vmatprep.mubr.f32.mxu0 0.0
    %988 = vmatmul.mubr.f32.gmra.mrb[0].mxu0 %v869
    %v989 = vpop.f32.mrb[0].mxu0
    %v990 = vadd.f32 %v842, %v989
    %v991 = vpop.f32.mrb[0].mxu0
    %992 = vmatprep.mubr.f32.mxu0 0.0
    %993 = vmatmul.mubr.f32.gmra.mrb[0].mxu0 %v872
    %v994 = vpop.f32.mrb[0].mxu0
    %v995 = vadd.f32 %v842, %v994
    %v996 = vpop.f32.mrb[0].mxu0
    %997 = vmatprep.mubr.f32.mxu0 0.0
    %998 = vmatmul.mubr.f32.gmra.mrb[0].mxu0 %v875
    %v999 = vpop.f32.mrb[0].mxu0
    %v1000 = vadd.f32 %v842, %v999
    %v1001 = vpop.f32.mrb[0].mxu0
    %1002 = vmatprep.mubr.f32.mxu0 0.0
    %1003 = vmatmul.mubr.f32.gmra.mrb[0].mxu0 %v878
    %v1004 = vpop.f32.mrb[0].mxu0
    %v1005 = vadd.f32 %v842, %v1004
    %v1006 = vpop.f32.mrb[0].mxu0
    %1007 = vmatprep.mubr.f32.mxu0 0.0
    %1008 = vmatmul.mubr.f32.gmra.mrb[0].mxu0 %v881
    %v1009 = vpop.f32.mrb[0].mxu0
    %v1010 = vadd.f32 %v842, %v1009
    %v1011 = vpop.f32.mrb[0].mxu0
    %1012 = vdwg.mxu0
    %v1013 = vld [vmem:[%s7] sm:$0xff]
    %v1014 = vld [vmem:[%s7 + $0x8] sm:$0xff]
    %v1015 = vld [vmem:[%s7 + $0x10] sm:$0xff]
    %v1016 = vld [vmem:[%s7 + $0x18] sm:$0xff]
    %v1017 = vld [vmem:[%s7 + $0x20] sm:$0xff]
    %v1018 = vld [vmem:[%s7 + $0x28] sm:$0xff]
    %v1019 = vld [vmem:[%s7 + $0x30] sm:$0xff]
    %v1020 = vld [vmem:[%s7 + $0x38] sm:$0xff]
    %v1021 = vld [vmem:[%s7 + $0x40] sm:$0xff]
    %v1022 = vld [vmem:[%s7 + $0x48] sm:$0xff]
    %v1023 = vld [vmem:[%s7 + $0x50] sm:$0xff]
    %v1024 = vld [vmem:[%s7 + $0x58] sm:$0xff]
    %v1025 = vld [vmem:[%s8] sm:$0x1]
    %v1027 = vlaneseq
    %v1028 = vshrl.u32 %v1027, 7
    %v1029 = vsub.s32 0, %v1028
    %v1030 = vrot.slane %v1025, %v1029
    %1032 = vmatprep.subr.mxu0 0.0
    %1033 = vmatpush1.msra.mxu0 %v1013
    %1034 = vmatprep.subr.mxu0 0.0
    %1035 = vmatpush1.msra.mxu0 %v1014
    %1036 = vmatprep.subr.mxu0 0.0
    %1037 = vmatpush1.msra.mxu0 %v1015
    %1038 = vmatprep.subr.mxu0 0.0
    %1039 = vmatpush1.msra.mxu0 %v1016
    %1040 = vmatprep.subr.mxu0 0.0
    %1041 = vmatpush1.msra.mxu0 %v1017
    %1042 = vmatprep.subr.mxu0 0.0
    %1043 = vmatpush1.msra.mxu0 %v1018
    %1044 = vmatprep.subr.mxu0 0.0
    %1045 = vmatpush1.msra.mxu0 %v1019
    %1046 = vmatprep.subr.mxu0 0.0
    %1047 = vmatpush1.msra.mxu0 %v1020
    %1048 = vmatprep.subr.mxu0 0.0
    %1049 = vmatpush1.msra.mxu0 %v1021
    %1050 = vmatprep.subr.mxu0 0.0
    %1051 = vmatpush1.msra.mxu0 %v1022
    %1052 = vmatprep.subr.mxu0 0.0
    %1053 = vmatpush1.msra.mxu0 %v1023
    %1054 = vmatprep.subr.mxu0 0.0
    %1055 = vmatpush1.msra.mxu0 %v1024
    %1056 = vmatprep.subr.mxu0 0.0
    %1057 = vmatpush1.msra.mxu0 0.0
    %1058 = vmatprep.subr.mxu0 0.0
    %1059 = vmatpush1.msra.mxu0 0.0
    %1060 = vmatprep.subr.mxu0 0.0
    %1061 = vmatpush1.msra.mxu0 0.0
    %1062 = vmatprep.subr.mxu0 0.0
    %1063 = vmatpush1.msra.mxu0 0.0
    %1064 = vmatprep.subr.mxu0 0.0
    %1065 = vmatpush1.msra.mxu0 0.0
    %1066 = vmatprep.subr.mxu0 0.0
    %1067 = vmatpush1.msra.mxu0 0.0
    %1068 = vmatprep.subr.mxu0 0.0
    %1069 = vmatpush1.msra.mxu0 0.0
    %1070 = vmatprep.subr.mxu0 0.0
    %1071 = vmatpush1.msra.mxu0 0.0
    %1072 = vmatprep.subr.mxu0 0.0
    %1073 = vmatpush1.msra.mxu0 0.0
    %1074 = vmatprep.subr.mxu0 0.0
    %1075 = vmatpush1.msra.mxu0 0.0
    %1076 = vmatprep.subr.mxu0 0.0
    %1077 = vmatpush1.msra.mxu0 0.0
    %1078 = vmatprep.subr.mxu0 0.0
    %1079 = vmatpush1.msra.mxu0 0.0
    %1080 = vmatprep.subr.mxu0 0.0
    %1081 = vmatpush1.msra.mxu0 0.0
    %1082 = vmatprep.subr.mxu0 0.0
    %1083 = vmatpush1.msra.mxu0 0.0
    %1084 = vmatprep.subr.mxu0 0.0
    %1085 = vmatpush1.msra.mxu0 0.0
    %1086 = vmatprep.subr.mxu0 0.0
    %1087 = vmatpush1.msra.mxu0 0.0
    %1088 = vmatprep.subr.mxu0 0.0
    %1089 = vmatpush1.msra.mxu0 0.0
    %1090 = vmatprep.subr.mxu0 0.0
    %1091 = vmatpush1.msra.mxu0 0.0
    %1092 = vmatprep.subr.mxu0 0.0
    %1093 = vmatpush1.msra.mxu0 0.0
    %1094 = vmatprep.subr.mxu0 0.0
    %1095 = vmatpush1.msra.mxu0 0.0
    %1096 = vmatprep.mubr.f32.mxu0 0.0
    %1097 = vmatmul.mubr.f32.gmra.mrb[0].mxu0 %v845
    %v1098 = vpop.f32.mrb[0].mxu0
    %v1099 = vadd.f32 %v1030, %v1098
    %v1100 = vpop.f32.mrb[0].mxu0
    %1101 = vmatprep.mubr.f32.mxu0 0.0
    %1102 = vmatmul.mubr.f32.gmra.mrb[0].mxu0 %v848
    %v1103 = vpop.f32.mrb[0].mxu0
    %v1104 = vadd.f32 %v1030, %v1103
    %v1105 = vpop.f32.mrb[0].mxu0
    %1106 = vmatprep.mubr.f32.mxu0 0.0
    %1107 = vmatmul.mubr.f32.gmra.mrb[0].mxu0 %v851
    %v1108 = vpop.f32.mrb[0].mxu0
    %v1109 = vadd.f32 %v1030, %v1108
    %v1110 = vpop.f32.mrb[0].mxu0
    %1111 = vmatprep.mubr.f32.mxu0 0.0
    %1112 = vmatmul.mubr.f32.gmra.mrb[0].mxu0 %v854
    %v1113 = vpop.f32.mrb[0].mxu0
    %v1114 = vadd.f32 %v1030, %v1113
    %v1115 = vpop.f32.mrb[0].mxu0
    %1116 = vmatprep.mubr.f32.mxu0 0.0
    %1117 = vmatmul.mubr.f32.gmra.mrb[0].mxu0 %v857
    %v1118 = vpop.f32.mrb[0].mxu0
    %v1119 = vadd.f32 %v1030, %v1118
    %v1120 = vpop.f32.mrb[0].mxu0
    %1121 = vmatprep.mubr.f32.mxu0 0.0
    %1122 = vmatmul.mubr.f32.gmra.mrb[0].mxu0 %v860
    %v1123 = vpop.f32.mrb[0].mxu0
    %v1124 = vadd.f32 %v1030, %v1123
    %v1125 = vpop.f32.mrb[0].mxu0
    %1126 = vmatprep.mubr.f32.mxu0 0.0
    %1127 = vmatmul.mubr.f32.gmra.mrb[0].mxu0 %v863
    %v1128 = vpop.f32.mrb[0].mxu0
    %v1129 = vadd.f32 %v1030, %v1128
    %v1130 = vpop.f32.mrb[0].mxu0
    %1131 = vmatprep.mubr.f32.mxu0 0.0
    %1132 = vmatmul.mubr.f32.gmra.mrb[0].mxu0 %v866
    %v1133 = vpop.f32.mrb[0].mxu0
    %v1134 = vadd.f32 %v1030, %v1133
    %v1135 = vpop.f32.mrb[0].mxu0
    %1136 = vmatprep.mubr.f32.mxu0 0.0
    %1137 = vmatmul.mubr.f32.gmra.mrb[0].mxu0 %v869
    %v1138 = vpop.f32.mrb[0].mxu0
    %v1139 = vadd.f32 %v1030, %v1138
    %v1140 = vpop.f32.mrb[0].mxu0
    %1141 = vmatprep.mubr.f32.mxu0 0.0
    %1142 = vmatmul.mubr.f32.gmra.mrb[0].mxu0 %v872
    %v1143 = vpop.f32.mrb[0].mxu0
    %v1144 = vadd.f32 %v1030, %v1143
    %v1145 = vpop.f32.mrb[0].mxu0
    %1146 = vmatprep.mubr.f32.mxu0 0.0
    %1147 = vmatmul.mubr.f32.gmra.mrb[0].mxu0 %v875
    %v1148 = vpop.f32.mrb[0].mxu0
    %v1149 = vadd.f32 %v1030, %v1148
    %v1150 = vpop.f32.mrb[0].mxu0
    %1151 = vmatprep.mubr.f32.mxu0 0.0
    %1152 = vmatmul.mubr.f32.gmra.mrb[0].mxu0 %v878
    %v1153 = vpop.f32.mrb[0].mxu0
    %v1154 = vadd.f32 %v1030, %v1153
    %v1155 = vpop.f32.mrb[0].mxu0
    %1156 = vmatprep.mubr.f32.mxu0 0.0
    %1157 = vmatmul.mubr.f32.gmra.mrb[0].mxu0 %v881
    %v1158 = vpop.f32.mrb[0].mxu0
    %v1159 = vadd.f32 %v1030, %v1158
    %v1160 = vpop.f32.mrb[0].mxu0
    %1161 = vdwg.mxu0
    %v1162 = vmax.f32 %v1099, -16.0
    %v1163 = vmax.f32 %v1104, -16.0
    %v1164 = vmax.f32 %v1109, -16.0
    %v1165 = vmax.f32 %v1114, -16.0
    %v1166 = vmax.f32 %v1119, -16.0
    %v1167 = vmax.f32 %v1124, -16.0
    %v1168 = vmax.f32 %v1129, -16.0
    %v1169 = vmax.f32 %v1134, -16.0
    %v1170 = vmax.f32 %v1139, -16.0
    %v1171 = vmax.f32 %v1144, -16.0
    %v1172 = vmax.f32 %v1149, -16.0
    %v1173 = vmax.f32 %v1154, -16.0
    %v1174 = vmax.f32 %v1159, -16.0
    %v1175 = vmin.f32 %v1162, 16.0
    %v1176 = vmin.f32 %v1163, 16.0
    %v1177 = vmin.f32 %v1164, 16.0
    %v1178 = vmin.f32 %v1165, 16.0
    %v1179 = vmin.f32 %v1166, 16.0
    %v1180 = vmin.f32 %v1167, 16.0
    %v1181 = vmin.f32 %v1168, 16.0
    %v1182 = vmin.f32 %v1169, 16.0
    %v1183 = vmin.f32 %v1170, 16.0
    %v1184 = vmin.f32 %v1171, 16.0
    %v1185 = vmin.f32 %v1172, 16.0
    %v1186 = vmin.f32 %v1173, 16.0
    %v1187 = vmin.f32 %v1174, 16.0
    %v1188 = vmul.f32 %v1175, 0.5
    %v1189 = vmul.f32 %v1176, 0.5
    %v1190 = vmul.f32 %v1177, 0.5
    %v1191 = vmul.f32 %v1178, 0.5
    %v1192 = vmul.f32 %v1179, 0.5
    %v1193 = vmul.f32 %v1180, 0.5
    %v1194 = vmul.f32 %v1181, 0.5
    %v1195 = vmul.f32 %v1182, 0.5
    %v1196 = vmul.f32 %v1183, 0.5
    %v1197 = vmul.f32 %v1184, 0.5
    %v1198 = vmul.f32 %v1185, 0.5
    %v1199 = vmul.f32 %v1186, 0.5
    %v1200 = vmul.f32 %v1187, 0.5
    %v1201 = vmul.f32 %v1188, 1.442695
    %v1202 = vpow.pop %v1201
    %v1203 = vmul.f32 %v1189, 1.442695
    %v1204 = vpow.pop %v1203
    %v1205 = vmul.f32 %v1190, 1.442695
    %v1206 = vpow.pop %v1205
    %v1207 = vmul.f32 %v1191, 1.442695
    %v1208 = vpow.pop %v1207
    %v1209 = vmul.f32 %v1192, 1.442695
    %v1210 = vpow.pop %v1209
    %v1211 = vmul.f32 %v1193, 1.442695
    %v1212 = vpow.pop %v1211
    %v1213 = vmul.f32 %v1194, 1.442695
    %v1214 = vpow.pop %v1213
    %v1215 = vmul.f32 %v1195, 1.442695
    %v1216 = vpow.pop %v1215
    %v1217 = vmul.f32 %v1196, 1.442695
    %v1218 = vpow.pop %v1217
    %v1219 = vmul.f32 %v1197, 1.442695
    %v1220 = vpow.pop %v1219
    %v1221 = vmul.f32 %v1198, 1.442695
    %v1222 = vpow.pop %v1221
    %v1223 = vmul.f32 %v1199, 1.442695
    %v1224 = vpow.pop %v1223
    %v1225 = vmul.f32 %v1200, 1.442695
    %v1226 = vpow.pop %v1225
    %1227 = vrot.lane.b32.xlu0 %v54, 112
    %v1228 = vpop.permute.xlu0 %1227
    %1229 = vrot.lane.b32.xlu0 %v55, 112
    %v1230 = vpop.permute.xlu0 %1229
    %1231 = vrot.lane.b32.xlu0 %v56, 112
    %v1232 = vpop.permute.xlu0 %1231
    %1233 = vrot.lane.b32.xlu0 %v57, 112
    %v1234 = vpop.permute.xlu0 %1233
    %1235 = vrot.lane.b32.xlu0 %v58, 112
    %v1236 = vpop.permute.xlu0 %1235
    %1237 = vrot.lane.b32.xlu0 %v59, 112
    %v1238 = vpop.permute.xlu0 %1237
    %1239 = vrot.lane.b32.xlu0 %v60, 112
    %v1240 = vpop.permute.xlu0 %1239
    %1241 = vrot.lane.b32.xlu0 %v61, 112
    %v1242 = vpop.permute.xlu0 %1241
    %1243 = vrot.lane.b32.xlu0 %v62, 112
    %v1244 = vpop.permute.xlu0 %1243
    %1245 = vrot.lane.b32.xlu0 %v63, 112
    %v1246 = vpop.permute.xlu0 %1245
    %1247 = vrot.lane.b32.xlu0 %v64, 112
    %v1248 = vpop.permute.xlu0 %1247
    %1249 = vrot.lane.b32.xlu0 %v65, 112
    %v1250 = vpop.permute.xlu0 %1249
    %1251 = vrot.lane.b32.xlu0 %v66, 112
    %v1252 = vpop.permute.xlu0 %1251
    %v1266 = vmul.f32 %v1202, %v1228
    %v1267 = vmul.f32 %v1204, %v1230
    %v1268 = vmul.f32 %v1206, %v1232
    %v1269 = vmul.f32 %v1208, %v1234
    %v1270 = vmul.f32 %v1210, %v1236
    %v1271 = vmul.f32 %v1212, %v1238
    %v1272 = vmul.f32 %v1214, %v1240
    %v1273 = vmul.f32 %v1216, %v1242
    %v1274 = vmul.f32 %v1218, %v1244
    %v1275 = vmul.f32 %v1220, %v1246
    %v1276 = vmul.f32 %v1222, %v1248
    %v1277 = vmul.f32 %v1224, %v1250
    %v1278 = vmul.f32 %v1226, %v1252
    %v1279 = vadd.f32 %v950, %v1266
    %v1280 = vadd.f32 %v955, %v1267
    %v1281 = vadd.f32 %v960, %v1268
    %v1282 = vadd.f32 %v965, %v1269
    %v1283 = vadd.f32 %v970, %v1270
    %v1284 = vadd.f32 %v975, %v1271
    %v1285 = vadd.f32 %v980, %v1272
    %v1286 = vadd.f32 %v985, %v1273
    %v1287 = vadd.f32 %v990, %v1274
    %v1288 = vadd.f32 %v995, %v1275
    %v1289 = vadd.f32 %v1000, %v1276
    %v1290 = vadd.f32 %v1005, %v1277
    %v1291 = vadd.f32 %v1010, %v1278
    %v1292 = vld [vmem:[%s9] sm:$0xff]
    %v1293 = vld [vmem:[%s10] sm:$0xff]
    %vm1294 = vcmask 64512
    %v1296 = vsel %vm1294, %v1279, 0
    %v1299 = vsel %vm1294, %v1280, 0
    %v1302 = vsel %vm1294, %v1281, 0
    %v1305 = vsel %vm1294, %v1282, 0
    %v1308 = vsel %vm1294, %v1283, 0
    %v1311 = vsel %vm1294, %v1284, 0
    %v1314 = vsel %vm1294, %v1285, 0
    %v1317 = vsel %vm1294, %v1286, 0
    %v1320 = vsel %vm1294, %v1287, 0
    %v1323 = vsel %vm1294, %v1288, 0
    %v1326 = vsel %vm1294, %v1289, 0
    %v1329 = vsel %vm1294, %v1290, 0
    %v1332 = vsel %vm1294, %v1291, 0
    %1334 = vmatprep.subr.mxu0 0.0
    %1335 = vmatpush1.msra.mxu0 %v1293
    %1336 = vmatprep.subr.mxu0 0.0
    %1337 = vmatpush1.msra.mxu0 0.0
    %1338 = vmatprep.subr.mxu0 0.0
    %1339 = vmatpush1.msra.mxu0 0.0
    %1340 = vmatprep.subr.mxu0 0.0
    %1341 = vmatpush1.msra.mxu0 0.0
    %1342 = vmatprep.subr.mxu0 0.0
    %1343 = vmatpush1.msra.mxu0 0.0
    %1344 = vmatprep.subr.mxu0 0.0
    %1345 = vmatpush1.msra.mxu0 0.0
    %1346 = vmatprep.subr.mxu0 0.0
    %1347 = vmatpush1.msra.mxu0 0.0
    %1348 = vmatprep.subr.mxu0 0.0
    %1349 = vmatpush1.msra.mxu0 0.0
    %1350 = vmatprep.subr.mxu0 0.0
    %1351 = vmatpush1.msra.mxu0 0.0
    %1352 = vmatprep.subr.mxu0 0.0
    %1353 = vmatpush1.msra.mxu0 0.0
    %1354 = vmatprep.subr.mxu0 0.0
    %1355 = vmatpush1.msra.mxu0 0.0
    %1356 = vmatprep.subr.mxu0 0.0
    %1357 = vmatpush1.msra.mxu0 0.0
    %1358 = vmatprep.subr.mxu0 0.0
    %1359 = vmatpush1.msra.mxu0 0.0
    %1360 = vmatprep.subr.mxu0 0.0
    %1361 = vmatpush1.msra.mxu0 0.0
    %1362 = vmatprep.subr.mxu0 0.0
    %1363 = vmatpush1.msra.mxu0 0.0
    %1364 = vmatprep.subr.mxu0 0.0
    %1365 = vmatpush1.msra.mxu0 0.0
    %1366 = vmatprep.subr.mxu0 0.0
    %1367 = vmatpush1.msra.mxu0 0.0
    %1368 = vmatprep.subr.mxu0 0.0
    %1369 = vmatpush1.msra.mxu0 0.0
    %1370 = vmatprep.subr.mxu0 0.0
    %1371 = vmatpush1.msra.mxu0 0.0
    %1372 = vmatprep.subr.mxu0 0.0
    %1373 = vmatpush1.msra.mxu0 0.0
    %1374 = vmatprep.subr.mxu0 0.0
    %1375 = vmatpush1.msra.mxu0 0.0
    %1376 = vmatprep.subr.mxu0 0.0
    %1377 = vmatpush1.msra.mxu0 0.0
    %1378 = vmatprep.subr.mxu0 0.0
    %1379 = vmatpush1.msra.mxu0 0.0
    %1380 = vmatprep.subr.mxu0 0.0
    %1381 = vmatpush1.msra.mxu0 0.0
    %1382 = vmatprep.subr.mxu0 0.0
    %1383 = vmatpush1.msra.mxu0 0.0
    %1384 = vmatprep.subr.mxu0 0.0
    %1385 = vmatpush1.msra.mxu0 0.0
    %1386 = vmatprep.subr.mxu0 0.0
    %1387 = vmatpush1.msra.mxu0 0.0
    %1388 = vmatprep.subr.mxu0 0.0
    %1389 = vmatpush1.msra.mxu0 0.0
    %1390 = vmatprep.subr.mxu0 0.0
    %1391 = vmatpush1.msra.mxu0 0.0
    %1392 = vmatprep.subr.mxu0 0.0
    %1393 = vmatpush1.msra.mxu0 0.0
    %1394 = vmatprep.subr.mxu0 0.0
    %1395 = vmatpush1.msra.mxu0 0.0
    %1396 = vmatprep.subr.mxu0 0.0
    %1397 = vmatpush1.msra.mxu0 0.0
    %1398 = vmatprep.mubr.f32.mxu0 0.0
    %1399 = vmatmul.mubr.f32.gmra.mrb[0].mxu0 %v1296
    %v1400 = vpop.f32.mrb[0].mxu0
    %v1401 = vadd.f32 0.0, %v1400
    %v1402 = vpop.f32.mrb[0].mxu0
    %1403 = vmatprep.mubr.f32.mxu0 0.0
    %1404 = vmatmul.mubr.f32.gmra.mrb[0].mxu0 %v1299
    %v1405 = vpop.f32.mrb[0].mxu0
    %v1406 = vadd.f32 0.0, %v1405
    %v1407 = vpop.f32.mrb[0].mxu0
    %1408 = vmatprep.mubr.f32.mxu0 0.0
    %1409 = vmatmul.mubr.f32.gmra.mrb[0].mxu0 %v1302
    %v1410 = vpop.f32.mrb[0].mxu0
    %v1411 = vadd.f32 0.0, %v1410
    %v1412 = vpop.f32.mrb[0].mxu0
    %1413 = vmatprep.mubr.f32.mxu0 0.0
    %1414 = vmatmul.mubr.f32.gmra.mrb[0].mxu0 %v1305
    %v1415 = vpop.f32.mrb[0].mxu0
    %v1416 = vadd.f32 0.0, %v1415
    %v1417 = vpop.f32.mrb[0].mxu0
    %1418 = vmatprep.mubr.f32.mxu0 0.0
    %1419 = vmatmul.mubr.f32.gmra.mrb[0].mxu0 %v1308
    %v1420 = vpop.f32.mrb[0].mxu0
    %v1421 = vadd.f32 0.0, %v1420
    %v1422 = vpop.f32.mrb[0].mxu0
    %1423 = vmatprep.mubr.f32.mxu0 0.0
    %1424 = vmatmul.mubr.f32.gmra.mrb[0].mxu0 %v1311
    %v1425 = vpop.f32.mrb[0].mxu0
    %v1426 = vadd.f32 0.0, %v1425
    %v1427 = vpop.f32.mrb[0].mxu0
    %1428 = vmatprep.mubr.f32.mxu0 0.0
    %1429 = vmatmul.mubr.f32.gmra.mrb[0].mxu0 %v1314
    %v1430 = vpop.f32.mrb[0].mxu0
    %v1431 = vadd.f32 0.0, %v1430
    %v1432 = vpop.f32.mrb[0].mxu0
    %1433 = vmatprep.mubr.f32.mxu0 0.0
    %1434 = vmatmul.mubr.f32.gmra.mrb[0].mxu0 %v1317
    %v1435 = vpop.f32.mrb[0].mxu0
    %v1436 = vadd.f32 0.0, %v1435
    %v1437 = vpop.f32.mrb[0].mxu0
    %1438 = vmatprep.mubr.f32.mxu0 0.0
    %1439 = vmatmul.mubr.f32.gmra.mrb[0].mxu0 %v1320
    %v1440 = vpop.f32.mrb[0].mxu0
    %v1441 = vadd.f32 0.0, %v1440
    %v1442 = vpop.f32.mrb[0].mxu0
    %1443 = vmatprep.mubr.f32.mxu0 0.0
    %1444 = vmatmul.mubr.f32.gmra.mrb[0].mxu0 %v1323
    %v1445 = vpop.f32.mrb[0].mxu0
    %v1446 = vadd.f32 0.0, %v1445
    %v1447 = vpop.f32.mrb[0].mxu0
    %1448 = vmatprep.mubr.f32.mxu0 0.0
    %1449 = vmatmul.mubr.f32.gmra.mrb[0].mxu0 %v1326
    %v1450 = vpop.f32.mrb[0].mxu0
    %v1451 = vadd.f32 0.0, %v1450
    %v1452 = vpop.f32.mrb[0].mxu0
    %1453 = vmatprep.mubr.f32.mxu0 0.0
    %1454 = vmatmul.mubr.f32.gmra.mrb[0].mxu0 %v1329
    %v1455 = vpop.f32.mrb[0].mxu0
    %v1456 = vadd.f32 0.0, %v1455
    %v1457 = vpop.f32.mrb[0].mxu0
    %1458 = vmatprep.mubr.f32.mxu0 0.0
    %1459 = vmatmul.mubr.f32.gmra.mrb[0].mxu0 %v1332
    %v1460 = vpop.f32.mrb[0].mxu0
    %v1461 = vadd.f32 0.0, %v1460
    %v1462 = vpop.f32.mrb[0].mxu0
    %1463 = vdwg.mxu0
    %v1464 = vsel %vm1294, %v54, 0
    %v1466 = vsel %vm1294, %v55, 0
    %v1468 = vsel %vm1294, %v56, 0
    %v1470 = vsel %vm1294, %v57, 0
    %v1472 = vsel %vm1294, %v58, 0
    %v1474 = vsel %vm1294, %v59, 0
    %v1476 = vsel %vm1294, %v60, 0
    %v1478 = vsel %vm1294, %v61, 0
    %v1480 = vsel %vm1294, %v62, 0
    %v1482 = vsel %vm1294, %v63, 0
    %v1484 = vsel %vm1294, %v64, 0
    %v1486 = vsel %vm1294, %v65, 0
    %v1488 = vsel %vm1294, %v66, 0
    %1490 = vmatprep.subr.mxu0 0.0
    %1491 = vmatpush1.msra.mxu0 %v1292
    %1492 = vmatprep.subr.mxu0 0.0
    %1493 = vmatpush1.msra.mxu0 0.0
    %1494 = vmatprep.subr.mxu0 0.0
    %1495 = vmatpush1.msra.mxu0 0.0
    %1496 = vmatprep.subr.mxu0 0.0
    %1497 = vmatpush1.msra.mxu0 0.0
    %1498 = vmatprep.subr.mxu0 0.0
    %1499 = vmatpush1.msra.mxu0 0.0
    %1500 = vmatprep.subr.mxu0 0.0
    %1501 = vmatpush1.msra.mxu0 0.0
    %1502 = vmatprep.subr.mxu0 0.0
    %1503 = vmatpush1.msra.mxu0 0.0
    %1504 = vmatprep.subr.mxu0 0.0
    %1505 = vmatpush1.msra.mxu0 0.0
    %1506 = vmatprep.subr.mxu0 0.0
    %1507 = vmatpush1.msra.mxu0 0.0
    %1508 = vmatprep.subr.mxu0 0.0
    %1509 = vmatpush1.msra.mxu0 0.0
    %1510 = vmatprep.subr.mxu0 0.0
    %1511 = vmatpush1.msra.mxu0 0.0
    %1512 = vmatprep.subr.mxu0 0.0
    %1513 = vmatpush1.msra.mxu0 0.0
    %1514 = vmatprep.subr.mxu0 0.0
    %1515 = vmatpush1.msra.mxu0 0.0
    %1516 = vmatprep.subr.mxu0 0.0
    %1517 = vmatpush1.msra.mxu0 0.0
    %1518 = vmatprep.subr.mxu0 0.0
    %1519 = vmatpush1.msra.mxu0 0.0
    %1520 = vmatprep.subr.mxu0 0.0
    %1521 = vmatpush1.msra.mxu0 0.0
    %1522 = vmatprep.subr.mxu0 0.0
    %1523 = vmatpush1.msra.mxu0 0.0
    %1524 = vmatprep.subr.mxu0 0.0
    %1525 = vmatpush1.msra.mxu0 0.0
    %1526 = vmatprep.subr.mxu0 0.0
    %1527 = vmatpush1.msra.mxu0 0.0
    %1528 = vmatprep.subr.mxu0 0.0
    %1529 = vmatpush1.msra.mxu0 0.0
    %1530 = vmatprep.subr.mxu0 0.0
    %1531 = vmatpush1.msra.mxu0 0.0
    %1532 = vmatprep.subr.mxu0 0.0
    %1533 = vmatpush1.msra.mxu0 0.0
    %1534 = vmatprep.subr.mxu0 0.0
    %1535 = vmatpush1.msra.mxu0 0.0
    %1536 = vmatprep.subr.mxu0 0.0
    %1537 = vmatpush1.msra.mxu0 0.0
    %1538 = vmatprep.subr.mxu0 0.0
    %1539 = vmatpush1.msra.mxu0 0.0
    %1540 = vmatprep.subr.mxu0 0.0
    %1541 = vmatpush1.msra.mxu0 0.0
    %1542 = vmatprep.subr.mxu0 0.0
    %1543 = vmatpush1.msra.mxu0 0.0
    %1544 = vmatprep.subr.mxu0 0.0
    %1545 = vmatpush1.msra.mxu0 0.0
    %1546 = vmatprep.subr.mxu0 0.0
    %1547 = vmatpush1.msra.mxu0 0.0
    %1548 = vmatprep.subr.mxu0 0.0
    %1549 = vmatpush1.msra.mxu0 0.0
    %1550 = vmatprep.subr.mxu0 0.0
    %1551 = vmatpush1.msra.mxu0 0.0
    %1552 = vmatprep.subr.mxu0 0.0
    %1553 = vmatpush1.msra.mxu0 0.0
    %1554 = vmatprep.mubr.f32.mxu0 0.0
    %1555 = vmatmul.mubr.f32.gmra.mrb[0].mxu0 %v1464
    %v1556 = vpop.f32.mrb[0].mxu0
    %v1557 = vadd.f32 %v1401, %v1556
    %v1558 = vpop.f32.mrb[0].mxu0
    %1559 = vmatprep.mubr.f32.mxu0 0.0
    %1560 = vmatmul.mubr.f32.gmra.mrb[0].mxu0 %v1466
    %v1561 = vpop.f32.mrb[0].mxu0
    %v1562 = vadd.f32 %v1406, %v1561
    %v1563 = vpop.f32.mrb[0].mxu0
    %1564 = vmatprep.mubr.f32.mxu0 0.0
    %1565 = vmatmul.mubr.f32.gmra.mrb[0].mxu0 %v1468
    %v1566 = vpop.f32.mrb[0].mxu0
    %v1567 = vadd.f32 %v1411, %v1566
    %v1568 = vpop.f32.mrb[0].mxu0
    %1569 = vmatprep.mubr.f32.mxu0 0.0
    %1570 = vmatmul.mubr.f32.gmra.mrb[0].mxu0 %v1470
    %v1571 = vpop.f32.mrb[0].mxu0
    %v1572 = vadd.f32 %v1416, %v1571
    %v1573 = vpop.f32.mrb[0].mxu0
    %1574 = vmatprep.mubr.f32.mxu0 0.0
    %1575 = vmatmul.mubr.f32.gmra.mrb[0].mxu0 %v1472
    %v1576 = vpop.f32.mrb[0].mxu0
    %v1577 = vadd.f32 %v1421, %v1576
    %v1578 = vpop.f32.mrb[0].mxu0
    %1579 = vmatprep.mubr.f32.mxu0 0.0
    %1580 = vmatmul.mubr.f32.gmra.mrb[0].mxu0 %v1474
    %v1581 = vpop.f32.mrb[0].mxu0
    %v1582 = vadd.f32 %v1426, %v1581
    %v1583 = vpop.f32.mrb[0].mxu0
    %1584 = vmatprep.mubr.f32.mxu0 0.0
    %1585 = vmatmul.mubr.f32.gmra.mrb[0].mxu0 %v1476
    %v1586 = vpop.f32.mrb[0].mxu0
    %v1587 = vadd.f32 %v1431, %v1586
    %v1588 = vpop.f32.mrb[0].mxu0
    %1589 = vmatprep.mubr.f32.mxu0 0.0
    %1590 = vmatmul.mubr.f32.gmra.mrb[0].mxu0 %v1478
    %v1591 = vpop.f32.mrb[0].mxu0
    %v1592 = vadd.f32 %v1436, %v1591
    %v1593 = vpop.f32.mrb[0].mxu0
    %1594 = vmatprep.mubr.f32.mxu0 0.0
    %1595 = vmatmul.mubr.f32.gmra.mrb[0].mxu0 %v1480
    %v1596 = vpop.f32.mrb[0].mxu0
    %v1597 = vadd.f32 %v1441, %v1596
    %v1598 = vpop.f32.mrb[0].mxu0
    %1599 = vmatprep.mubr.f32.mxu0 0.0
    %1600 = vmatmul.mubr.f32.gmra.mrb[0].mxu0 %v1482
    %v1601 = vpop.f32.mrb[0].mxu0
    %v1602 = vadd.f32 %v1446, %v1601
    %v1603 = vpop.f32.mrb[0].mxu0
    %1604 = vmatprep.mubr.f32.mxu0 0.0
    %1605 = vmatmul.mubr.f32.gmra.mrb[0].mxu0 %v1484
    %v1606 = vpop.f32.mrb[0].mxu0
    %v1607 = vadd.f32 %v1451, %v1606
    %v1608 = vpop.f32.mrb[0].mxu0
    %1609 = vmatprep.mubr.f32.mxu0 0.0
    %1610 = vmatmul.mubr.f32.gmra.mrb[0].mxu0 %v1486
    %v1611 = vpop.f32.mrb[0].mxu0
    %v1612 = vadd.f32 %v1456, %v1611
    %v1613 = vpop.f32.mrb[0].mxu0
    %1614 = vmatprep.mubr.f32.mxu0 0.0
    %1615 = vmatmul.mubr.f32.gmra.mrb[0].mxu0 %v1488
    %v1616 = vpop.f32.mrb[0].mxu0
    %v1617 = vadd.f32 %v1461, %v1616
    %v1618 = vpop.f32.mrb[0].mxu0
    %1619 = vdwg.mxu0
    %v1620 = vld [vmem:[%s11] sm:$0x1]
    %v1622 = vlaneseq
    %v1623 = vshrl.u32 %v1622, 7
    %v1624 = vsub.s32 0, %v1623
    %v1625 = vrot.slane %v1620, %v1624
    %v1627 = vadd.f32 %v1557, %v1625
    %v1628 = vadd.f32 %v1562, %v1625
    %v1629 = vadd.f32 %v1567, %v1625
    %v1630 = vadd.f32 %v1572, %v1625
    %v1631 = vadd.f32 %v1577, %v1625
    %v1632 = vadd.f32 %v1582, %v1625
    %v1633 = vadd.f32 %v1587, %v1625
    %v1634 = vadd.f32 %v1592, %v1625
    %v1635 = vadd.f32 %v1597, %v1625
    %v1636 = vadd.f32 %v1602, %v1625
    %v1637 = vadd.f32 %v1607, %v1625
    %v1638 = vadd.f32 %v1612, %v1625
    %v1639 = vadd.f32 %v1617, %v1625
    %v1640 = vmax.f32 %v1627, 0.0
    %v1641 = vmax.f32 %v1628, 0.0
    %v1642 = vmax.f32 %v1629, 0.0
    %v1643 = vmax.f32 %v1630, 0.0
    %v1644 = vmax.f32 %v1631, 0.0
    %v1645 = vmax.f32 %v1632, 0.0
    %v1646 = vmax.f32 %v1633, 0.0
    %v1647 = vmax.f32 %v1634, 0.0
    %v1648 = vmax.f32 %v1635, 0.0
    %v1649 = vmax.f32 %v1636, 0.0
    %v1650 = vmax.f32 %v1637, 0.0
    %v1651 = vmax.f32 %v1638, 0.0
    %v1652 = vmax.f32 %v1639, 0.0
    %v1653 = vld [vmem:[%s12] sm:$0xff]
    %v1654 = vld [vmem:[%s12 + $0x8] sm:$0xff]
    %v1655 = vld [vmem:[%s12 + $0x10] sm:$0xff]
    %v1656 = vld [vmem:[%s12 + $0x18] sm:$0xff]
    %v1657 = vld [vmem:[%s13] sm:$0x1]
    %v1659 = vlaneseq
    %v1660 = vshrl.u32 %v1659, 7
    %v1661 = vsub.s32 0, %v1660
    %v1662 = vrot.slane %v1657, %v1661
    %vm1664 = vcmask 261120
    %v1666 = vsel %vm1664, %v1640, 0
    %v1669 = vsel %vm1664, %v1641, 0
    %v1672 = vsel %vm1664, %v1642, 0
    %v1675 = vsel %vm1664, %v1643, 0
    %v1678 = vsel %vm1664, %v1644, 0
    %v1681 = vsel %vm1664, %v1645, 0
    %v1684 = vsel %vm1664, %v1646, 0
    %v1687 = vsel %vm1664, %v1647, 0
    %v1690 = vsel %vm1664, %v1648, 0
    %v1693 = vsel %vm1664, %v1649, 0
    %v1696 = vsel %vm1664, %v1650, 0
    %v1699 = vsel %vm1664, %v1651, 0
    %v1702 = vsel %vm1664, %v1652, 0
    %1704 = vmatprep.subr.mxu0 0.0
    %1705 = vmatpush1.msra.mxu0 %v1653
    %1706 = vmatprep.subr.mxu0 0.0
    %1707 = vmatpush1.msra.mxu0 %v1654
    %1708 = vmatprep.subr.mxu0 0.0
    %1709 = vmatpush1.msra.mxu0 %v1655
    %1710 = vmatprep.subr.mxu0 0.0
    %1711 = vmatpush1.msra.mxu0 %v1656
    %1712 = vmatprep.subr.mxu0 0.0
    %1713 = vmatpush1.msra.mxu0 0.0
    %1714 = vmatprep.subr.mxu0 0.0
    %1715 = vmatpush1.msra.mxu0 0.0
    %1716 = vmatprep.subr.mxu0 0.0
    %1717 = vmatpush1.msra.mxu0 0.0
    %1718 = vmatprep.subr.mxu0 0.0
    %1719 = vmatpush1.msra.mxu0 0.0
    %1720 = vmatprep.subr.mxu0 0.0
    %1721 = vmatpush1.msra.mxu0 0.0
    %1722 = vmatprep.subr.mxu0 0.0
    %1723 = vmatpush1.msra.mxu0 0.0
    %1724 = vmatprep.subr.mxu0 0.0
    %1725 = vmatpush1.msra.mxu0 0.0
    %1726 = vmatprep.subr.mxu0 0.0
    %1727 = vmatpush1.msra.mxu0 0.0
    %1728 = vmatprep.subr.mxu0 0.0
    %1729 = vmatpush1.msra.mxu0 0.0
    %1730 = vmatprep.subr.mxu0 0.0
    %1731 = vmatpush1.msra.mxu0 0.0
    %1732 = vmatprep.subr.mxu0 0.0
    %1733 = vmatpush1.msra.mxu0 0.0
    %1734 = vmatprep.subr.mxu0 0.0
    %1735 = vmatpush1.msra.mxu0 0.0
    %1736 = vmatprep.subr.mxu0 0.0
    %1737 = vmatpush1.msra.mxu0 0.0
    %1738 = vmatprep.subr.mxu0 0.0
    %1739 = vmatpush1.msra.mxu0 0.0
    %1740 = vmatprep.subr.mxu0 0.0
    %1741 = vmatpush1.msra.mxu0 0.0
    %1742 = vmatprep.subr.mxu0 0.0
    %1743 = vmatpush1.msra.mxu0 0.0
    %1744 = vmatprep.subr.mxu0 0.0
    %1745 = vmatpush1.msra.mxu0 0.0
    %1746 = vmatprep.subr.mxu0 0.0
    %1747 = vmatpush1.msra.mxu0 0.0
    %1748 = vmatprep.subr.mxu0 0.0
    %1749 = vmatpush1.msra.mxu0 0.0
    %1750 = vmatprep.subr.mxu0 0.0
    %1751 = vmatpush1.msra.mxu0 0.0
    %1752 = vmatprep.subr.mxu0 0.0
    %1753 = vmatpush1.msra.mxu0 0.0
    %1754 = vmatprep.subr.mxu0 0.0
    %1755 = vmatpush1.msra.mxu0 0.0
    %1756 = vmatprep.subr.mxu0 0.0
    %1757 = vmatpush1.msra.mxu0 0.0
    %1758 = vmatprep.subr.mxu0 0.0
    %1759 = vmatpush1.msra.mxu0 0.0
    %1760 = vmatprep.subr.mxu0 0.0
    %1761 = vmatpush1.msra.mxu0 0.0
    %1762 = vmatprep.subr.mxu0 0.0
    %1763 = vmatpush1.msra.mxu0 0.0
    %1764 = vmatprep.subr.mxu0 0.0
    %1765 = vmatpush1.msra.mxu0 0.0
    %1766 = vmatprep.subr.mxu0 0.0
    %1767 = vmatpush1.msra.mxu0 0.0
    %1768 = vmatprep.mubr.f32.mxu0 0.0
    %1769 = vmatmul.mubr.f32.gmra.mrb[0].mxu0 %v1666
    %v1770 = vpop.f32.mrb[0].mxu0
    %v1771 = vadd.f32 %v1662, %v1770
    %v1772 = vpop.f32.mrb[0].mxu0
    %1773 = vmatprep.mubr.f32.mxu0 0.0
    %1774 = vmatmul.mubr.f32.gmra.mrb[0].mxu0 %v1669
    %v1775 = vpop.f32.mrb[0].mxu0
    %v1776 = vadd.f32 %v1662, %v1775
    %v1777 = vpop.f32.mrb[0].mxu0
    %1778 = vmatprep.mubr.f32.mxu0 0.0
    %1779 = vmatmul.mubr.f32.gmra.mrb[0].mxu0 %v1672
    %v1780 = vpop.f32.mrb[0].mxu0
    %v1781 = vadd.f32 %v1662, %v1780
    %v1782 = vpop.f32.mrb[0].mxu0
    %1783 = vmatprep.mubr.f32.mxu0 0.0
    %1784 = vmatmul.mubr.f32.gmra.mrb[0].mxu0 %v1675
    %v1785 = vpop.f32.mrb[0].mxu0
    %v1786 = vadd.f32 %v1662, %v1785
    %v1787 = vpop.f32.mrb[0].mxu0
    %1788 = vmatprep.mubr.f32.mxu0 0.0
    %1789 = vmatmul.mubr.f32.gmra.mrb[0].mxu0 %v1678
    %v1790 = vpop.f32.mrb[0].mxu0
    %v1791 = vadd.f32 %v1662, %v1790
    %v1792 = vpop.f32.mrb[0].mxu0
    %1793 = vmatprep.mubr.f32.mxu0 0.0
    %1794 = vmatmul.mubr.f32.gmra.mrb[0].mxu0 %v1681
    %v1795 = vpop.f32.mrb[0].mxu0
    %v1796 = vadd.f32 %v1662, %v1795
    %v1797 = vpop.f32.mrb[0].mxu0
    %1798 = vmatprep.mubr.f32.mxu0 0.0
    %1799 = vmatmul.mubr.f32.gmra.mrb[0].mxu0 %v1684
    %v1800 = vpop.f32.mrb[0].mxu0
    %v1801 = vadd.f32 %v1662, %v1800
    %v1802 = vpop.f32.mrb[0].mxu0
    %1803 = vmatprep.mubr.f32.mxu0 0.0
    %1804 = vmatmul.mubr.f32.gmra.mrb[0].mxu0 %v1687
    %v1805 = vpop.f32.mrb[0].mxu0
    %v1806 = vadd.f32 %v1662, %v1805
    %v1807 = vpop.f32.mrb[0].mxu0
    %1808 = vmatprep.mubr.f32.mxu0 0.0
    %1809 = vmatmul.mubr.f32.gmra.mrb[0].mxu0 %v1690
    %v1810 = vpop.f32.mrb[0].mxu0
    %v1811 = vadd.f32 %v1662, %v1810
    %v1812 = vpop.f32.mrb[0].mxu0
    %1813 = vmatprep.mubr.f32.mxu0 0.0
    %1814 = vmatmul.mubr.f32.gmra.mrb[0].mxu0 %v1693
    %v1815 = vpop.f32.mrb[0].mxu0
    %v1816 = vadd.f32 %v1662, %v1815
    %v1817 = vpop.f32.mrb[0].mxu0
    %1818 = vmatprep.mubr.f32.mxu0 0.0
    %1819 = vmatmul.mubr.f32.gmra.mrb[0].mxu0 %v1696
    %v1820 = vpop.f32.mrb[0].mxu0
    %v1821 = vadd.f32 %v1662, %v1820
    %v1822 = vpop.f32.mrb[0].mxu0
    %1823 = vmatprep.mubr.f32.mxu0 0.0
    %1824 = vmatmul.mubr.f32.gmra.mrb[0].mxu0 %v1699
    %v1825 = vpop.f32.mrb[0].mxu0
    %v1826 = vadd.f32 %v1662, %v1825
    %v1827 = vpop.f32.mrb[0].mxu0
    %1828 = vmatprep.mubr.f32.mxu0 0.0
    %1829 = vmatmul.mubr.f32.gmra.mrb[0].mxu0 %v1702
    %v1830 = vpop.f32.mrb[0].mxu0
    %v1831 = vadd.f32 %v1662, %v1830
    %v1832 = vpop.f32.mrb[0].mxu0
    %1833 = vdwg.mxu0
    %v1834 = vld [vmem:[%s14] sm:$0xff]
    %v1835 = vld [vmem:[%s14 + $0x8] sm:$0xff]
    %v1836 = vld [vmem:[%s14 + $0x10] sm:$0xff]
    %v1837 = vld [vmem:[%s14 + $0x18] sm:$0xff]
    %v1838 = vld [vmem:[%s15] sm:$0x1]
    %v1840 = vlaneseq
    %v1841 = vshrl.u32 %v1840, 7
    %v1842 = vsub.s32 0, %v1841
    %v1843 = vrot.slane %v1838, %v1842
    %1845 = vmatprep.subr.mxu0 0.0
    %1846 = vmatpush1.msra.mxu0 %v1834
    %1847 = vmatprep.subr.mxu0 0.0
    %1848 = vmatpush1.msra.mxu0 %v1835
    %1849 = vmatprep.subr.mxu0 0.0
    %1850 = vmatpush1.msra.mxu0 %v1836
    %1851 = vmatprep.subr.mxu0 0.0
    %1852 = vmatpush1.msra.mxu0 %v1837
    %1853 = vmatprep.subr.mxu0 0.0
    %1854 = vmatpush1.msra.mxu0 0.0
    %1855 = vmatprep.subr.mxu0 0.0
    %1856 = vmatpush1.msra.mxu0 0.0
    %1857 = vmatprep.subr.mxu0 0.0
    %1858 = vmatpush1.msra.mxu0 0.0
    %1859 = vmatprep.subr.mxu0 0.0
    %1860 = vmatpush1.msra.mxu0 0.0
    %1861 = vmatprep.subr.mxu0 0.0
    %1862 = vmatpush1.msra.mxu0 0.0
    %1863 = vmatprep.subr.mxu0 0.0
    %1864 = vmatpush1.msra.mxu0 0.0
    %1865 = vmatprep.subr.mxu0 0.0
    %1866 = vmatpush1.msra.mxu0 0.0
    %1867 = vmatprep.subr.mxu0 0.0
    %1868 = vmatpush1.msra.mxu0 0.0
    %1869 = vmatprep.subr.mxu0 0.0
    %1870 = vmatpush1.msra.mxu0 0.0
    %1871 = vmatprep.subr.mxu0 0.0
    %1872 = vmatpush1.msra.mxu0 0.0
    %1873 = vmatprep.subr.mxu0 0.0
    %1874 = vmatpush1.msra.mxu0 0.0
    %1875 = vmatprep.subr.mxu0 0.0
    %1876 = vmatpush1.msra.mxu0 0.0
    %1877 = vmatprep.subr.mxu0 0.0
    %1878 = vmatpush1.msra.mxu0 0.0
    %1879 = vmatprep.subr.mxu0 0.0
    %1880 = vmatpush1.msra.mxu0 0.0
    %1881 = vmatprep.subr.mxu0 0.0
    %1882 = vmatpush1.msra.mxu0 0.0
    %1883 = vmatprep.subr.mxu0 0.0
    %1884 = vmatpush1.msra.mxu0 0.0
    %1885 = vmatprep.subr.mxu0 0.0
    %1886 = vmatpush1.msra.mxu0 0.0
    %1887 = vmatprep.subr.mxu0 0.0
    %1888 = vmatpush1.msra.mxu0 0.0
    %1889 = vmatprep.subr.mxu0 0.0
    %1890 = vmatpush1.msra.mxu0 0.0
    %1891 = vmatprep.subr.mxu0 0.0
    %1892 = vmatpush1.msra.mxu0 0.0
    %1893 = vmatprep.subr.mxu0 0.0
    %1894 = vmatpush1.msra.mxu0 0.0
    %1895 = vmatprep.subr.mxu0 0.0
    %1896 = vmatpush1.msra.mxu0 0.0
    %1897 = vmatprep.subr.mxu0 0.0
    %1898 = vmatpush1.msra.mxu0 0.0
    %1899 = vmatprep.subr.mxu0 0.0
    %1900 = vmatpush1.msra.mxu0 0.0
    %1901 = vmatprep.subr.mxu0 0.0
    %1902 = vmatpush1.msra.mxu0 0.0
    %1903 = vmatprep.subr.mxu0 0.0
    %1904 = vmatpush1.msra.mxu0 0.0
    %1905 = vmatprep.subr.mxu0 0.0
    %1906 = vmatpush1.msra.mxu0 0.0
    %1907 = vmatprep.subr.mxu0 0.0
    %1908 = vmatpush1.msra.mxu0 0.0
    %1909 = vmatprep.mubr.f32.mxu0 0.0
    %1910 = vmatmul.mubr.f32.gmra.mrb[0].mxu0 %v1666
    %v1911 = vpop.f32.mrb[0].mxu0
    %v1912 = vadd.f32 %v1843, %v1911
    %v1913 = vpop.f32.mrb[0].mxu0
    %1914 = vmatprep.mubr.f32.mxu0 0.0
    %1915 = vmatmul.mubr.f32.gmra.mrb[0].mxu0 %v1669
    %v1916 = vpop.f32.mrb[0].mxu0
    %v1917 = vadd.f32 %v1843, %v1916
    %v1918 = vpop.f32.mrb[0].mxu0
    %1919 = vmatprep.mubr.f32.mxu0 0.0
    %1920 = vmatmul.mubr.f32.gmra.mrb[0].mxu0 %v1672
    %v1921 = vpop.f32.mrb[0].mxu0
    %v1922 = vadd.f32 %v1843, %v1921
    %v1923 = vpop.f32.mrb[0].mxu0
    %1924 = vmatprep.mubr.f32.mxu0 0.0
    %1925 = vmatmul.mubr.f32.gmra.mrb[0].mxu0 %v1675
    %v1926 = vpop.f32.mrb[0].mxu0
    %v1927 = vadd.f32 %v1843, %v1926
    %v1928 = vpop.f32.mrb[0].mxu0
    %1929 = vmatprep.mubr.f32.mxu0 0.0
    %1930 = vmatmul.mubr.f32.gmra.mrb[0].mxu0 %v1678
    %v1931 = vpop.f32.mrb[0].mxu0
    %v1932 = vadd.f32 %v1843, %v1931
    %v1933 = vpop.f32.mrb[0].mxu0
    %1934 = vmatprep.mubr.f32.mxu0 0.0
    %1935 = vmatmul.mubr.f32.gmra.mrb[0].mxu0 %v1681
    %v1936 = vpop.f32.mrb[0].mxu0
    %v1937 = vadd.f32 %v1843, %v1936
    %v1938 = vpop.f32.mrb[0].mxu0
    %1939 = vmatprep.mubr.f32.mxu0 0.0
    %1940 = vmatmul.mubr.f32.gmra.mrb[0].mxu0 %v1684
    %v1941 = vpop.f32.mrb[0].mxu0
    %v1942 = vadd.f32 %v1843, %v1941
    %v1943 = vpop.f32.mrb[0].mxu0
    %1944 = vmatprep.mubr.f32.mxu0 0.0
    %1945 = vmatmul.mubr.f32.gmra.mrb[0].mxu0 %v1687
    %v1946 = vpop.f32.mrb[0].mxu0
    %v1947 = vadd.f32 %v1843, %v1946
    %v1948 = vpop.f32.mrb[0].mxu0
    %1949 = vmatprep.mubr.f32.mxu0 0.0
    %1950 = vmatmul.mubr.f32.gmra.mrb[0].mxu0 %v1690
    %v1951 = vpop.f32.mrb[0].mxu0
    %v1952 = vadd.f32 %v1843, %v1951
    %v1953 = vpop.f32.mrb[0].mxu0
    %1954 = vmatprep.mubr.f32.mxu0 0.0
    %1955 = vmatmul.mubr.f32.gmra.mrb[0].mxu0 %v1693
    %v1956 = vpop.f32.mrb[0].mxu0
    %v1957 = vadd.f32 %v1843, %v1956
    %v1958 = vpop.f32.mrb[0].mxu0
    %1959 = vmatprep.mubr.f32.mxu0 0.0
    %1960 = vmatmul.mubr.f32.gmra.mrb[0].mxu0 %v1696
    %v1961 = vpop.f32.mrb[0].mxu0
    %v1962 = vadd.f32 %v1843, %v1961
    %v1963 = vpop.f32.mrb[0].mxu0
    %1964 = vmatprep.mubr.f32.mxu0 0.0
    %1965 = vmatmul.mubr.f32.gmra.mrb[0].mxu0 %v1699
    %v1966 = vpop.f32.mrb[0].mxu0
    %v1967 = vadd.f32 %v1843, %v1966
    %v1968 = vpop.f32.mrb[0].mxu0
    %1969 = vmatprep.mubr.f32.mxu0 0.0
    %1970 = vmatmul.mubr.f32.gmra.mrb[0].mxu0 %v1702
    %v1971 = vpop.f32.mrb[0].mxu0
    %v1972 = vadd.f32 %v1843, %v1971
    %v1973 = vpop.f32.mrb[0].mxu0
    %1974 = vdwg.mxu0
    %v1975 = vmax.f32 %v1912, -16.0
    %v1976 = vmax.f32 %v1917, -16.0
    %v1977 = vmax.f32 %v1922, -16.0
    %v1978 = vmax.f32 %v1927, -16.0
    %v1979 = vmax.f32 %v1932, -16.0
    %v1980 = vmax.f32 %v1937, -16.0
    %v1981 = vmax.f32 %v1942, -16.0
    %v1982 = vmax.f32 %v1947, -16.0
    %v1983 = vmax.f32 %v1952, -16.0
    %v1984 = vmax.f32 %v1957, -16.0
    %v1985 = vmax.f32 %v1962, -16.0
    %v1986 = vmax.f32 %v1967, -16.0
    %v1987 = vmax.f32 %v1972, -16.0
    %v1988 = vmin.f32 %v1975, 16.0
    %v1989 = vmin.f32 %v1976, 16.0
    %v1990 = vmin.f32 %v1977, 16.0
    %v1991 = vmin.f32 %v1978, 16.0
    %v1992 = vmin.f32 %v1979, 16.0
    %v1993 = vmin.f32 %v1980, 16.0
    %v1994 = vmin.f32 %v1981, 16.0
    %v1995 = vmin.f32 %v1982, 16.0
    %v1996 = vmin.f32 %v1983, 16.0
    %v1997 = vmin.f32 %v1984, 16.0
    %v1998 = vmin.f32 %v1985, 16.0
    %v1999 = vmin.f32 %v1986, 16.0
    %v2000 = vmin.f32 %v1987, 16.0
    %2014 = vrot.lane.b32.xlu0 %v1175, 8
    %v2015 = vpop.permute.xlu0 %2014
    %2016 = vrot.lane.b32.xlu0 %v1176, 8
    %v2017 = vpop.permute.xlu0 %2016
    %2018 = vrot.lane.b32.xlu0 %v1177, 8
    %v2019 = vpop.permute.xlu0 %2018
    %2020 = vrot.lane.b32.xlu0 %v1178, 8
    %v2021 = vpop.permute.xlu0 %2020
    %2022 = vrot.lane.b32.xlu0 %v1179, 8
    %v2023 = vpop.permute.xlu0 %2022
    %2024 = vrot.lane.b32.xlu0 %v1180, 8
    %v2025 = vpop.permute.xlu0 %2024
    %2026 = vrot.lane.b32.xlu0 %v1181, 8
    %v2027 = vpop.permute.xlu0 %2026
    %2028 = vrot.lane.b32.xlu0 %v1182, 8
    %v2029 = vpop.permute.xlu0 %2028
    %2030 = vrot.lane.b32.xlu0 %v1183, 8
    %v2031 = vpop.permute.xlu0 %2030
    %2032 = vrot.lane.b32.xlu0 %v1184, 8
    %v2033 = vpop.permute.xlu0 %2032
    %2034 = vrot.lane.b32.xlu0 %v1185, 8
    %v2035 = vpop.permute.xlu0 %2034
    %2036 = vrot.lane.b32.xlu0 %v1186, 8
    %v2037 = vpop.permute.xlu0 %2036
    %2038 = vrot.lane.b32.xlu0 %v1187, 8
    %v2039 = vpop.permute.xlu0 %2038
    %2053 = vrot.lane.b32.xlu0 %v1279, 16
    %v2054 = vpop.permute.xlu0 %2053
    %2055 = vrot.lane.b32.xlu0 %v1280, 16
    %v2056 = vpop.permute.xlu0 %2055
    %2057 = vrot.lane.b32.xlu0 %v1281, 16
    %v2058 = vpop.permute.xlu0 %2057
    %2059 = vrot.lane.b32.xlu0 %v1282, 16
    %v2060 = vpop.permute.xlu0 %2059
    %2061 = vrot.lane.b32.xlu0 %v1283, 16
    %v2062 = vpop.permute.xlu0 %2061
    %2063 = vrot.lane.b32.xlu0 %v1284, 16
    %v2064 = vpop.permute.xlu0 %2063
    %2065 = vrot.lane.b32.xlu0 %v1285, 16
    %v2066 = vpop.permute.xlu0 %2065
    %2067 = vrot.lane.b32.xlu0 %v1286, 16
    %v2068 = vpop.permute.xlu0 %2067
    %2069 = vrot.lane.b32.xlu0 %v1287, 16
    %v2070 = vpop.permute.xlu0 %2069
    %2071 = vrot.lane.b32.xlu0 %v1288, 16
    %v2072 = vpop.permute.xlu0 %2071
    %2073 = vrot.lane.b32.xlu0 %v1289, 16
    %v2074 = vpop.permute.xlu0 %2073
    %2075 = vrot.lane.b32.xlu0 %v1290, 16
    %v2076 = vpop.permute.xlu0 %2075
    %2077 = vrot.lane.b32.xlu0 %v1291, 16
    %v2078 = vpop.permute.xlu0 %2077
    %2105 = vrot.lane.b32.xlu0 %v1771, 24
    %v2106 = vpop.permute.xlu0 %2105
    %2107 = vrot.lane.b32.xlu0 %v1776, 24
    %v2108 = vpop.permute.xlu0 %2107
    %2109 = vrot.lane.b32.xlu0 %v1781, 24
    %v2110 = vpop.permute.xlu0 %2109
    %2111 = vrot.lane.b32.xlu0 %v1786, 24
    %v2112 = vpop.permute.xlu0 %2111
    %2113 = vrot.lane.b32.xlu0 %v1791, 24
    %v2114 = vpop.permute.xlu0 %2113
    %2115 = vrot.lane.b32.xlu0 %v1796, 24
    %v2116 = vpop.permute.xlu0 %2115
    %2117 = vrot.lane.b32.xlu0 %v1801, 24
    %v2118 = vpop.permute.xlu0 %2117
    %2119 = vrot.lane.b32.xlu0 %v1806, 24
    %v2120 = vpop.permute.xlu0 %2119
    %2121 = vrot.lane.b32.xlu0 %v1811, 24
    %v2122 = vpop.permute.xlu0 %2121
    %2123 = vrot.lane.b32.xlu0 %v1816, 24
    %v2124 = vpop.permute.xlu0 %2123
    %2125 = vrot.lane.b32.xlu0 %v1821, 24
    %v2126 = vpop.permute.xlu0 %2125
    %2127 = vrot.lane.b32.xlu0 %v1826, 24
    %v2128 = vpop.permute.xlu0 %2127
    %2129 = vrot.lane.b32.xlu0 %v1831, 24
    %v2130 = vpop.permute.xlu0 %2129
    %2157 = vrot.lane.b32.xlu0 %v1988, 32
    %v2158 = vpop.permute.xlu0 %2157
    %2159 = vrot.lane.b32.xlu0 %v1989, 32
    %v2160 = vpop.permute.xlu0 %2159
    %2161 = vrot.lane.b32.xlu0 %v1990, 32
    %v2162 = vpop.permute.xlu0 %2161
    %2163 = vrot.lane.b32.xlu0 %v1991, 32
    %v2164 = vpop.permute.xlu0 %2163
    %2165 = vrot.lane.b32.xlu0 %v1992, 32
    %v2166 = vpop.permute.xlu0 %2165
    %2167 = vrot.lane.b32.xlu0 %v1993, 32
    %v2168 = vpop.permute.xlu0 %2167
    %2169 = vrot.lane.b32.xlu0 %v1994, 32
    %v2170 = vpop.permute.xlu0 %2169
    %2171 = vrot.lane.b32.xlu0 %v1995, 32
    %v2172 = vpop.permute.xlu0 %2171
    %2173 = vrot.lane.b32.xlu0 %v1996, 32
    %v2174 = vpop.permute.xlu0 %2173
    %2175 = vrot.lane.b32.xlu0 %v1997, 32
    %v2176 = vpop.permute.xlu0 %2175
    %2177 = vrot.lane.b32.xlu0 %v1998, 32
    %v2178 = vpop.permute.xlu0 %2177
    %2179 = vrot.lane.b32.xlu0 %v1999, 32
    %v2180 = vpop.permute.xlu0 %2179
    %2181 = vrot.lane.b32.xlu0 %v2000, 32
    %v2182 = vpop.permute.xlu0 %2181
    %v2196 = vsel %vm1294, %v950, %v2015
    %v2197 = vsel %vm1294, %v955, %v2017
    %v2198 = vsel %vm1294, %v960, %v2019
    %v2199 = vsel %vm1294, %v965, %v2021
    %v2200 = vsel %vm1294, %v970, %v2023
    %v2201 = vsel %vm1294, %v975, %v2025
    %v2202 = vsel %vm1294, %v980, %v2027
    %v2203 = vsel %vm1294, %v985, %v2029
    %v2204 = vsel %vm1294, %v990, %v2031
    %v2205 = vsel %vm1294, %v995, %v2033
    %v2206 = vsel %vm1294, %v1000, %v2035
    %v2207 = vsel %vm1294, %v1005, %v2037
    %v2208 = vsel %vm1294, %v1010, %v2039
    %v2209 = vsel %vm76, %v2196, %v2054
    %v2210 = vsel %vm76, %v2197, %v2056
    %v2211 = vsel %vm76, %v2198, %v2058
    %v2212 = vsel %vm76, %v2199, %v2060
    %v2213 = vsel %vm76, %v2200, %v2062
    %v2214 = vsel %vm76, %v2201, %v2064
    %v2215 = vsel %vm76, %v2202, %v2066
    %v2216 = vsel %vm76, %v2203, %v2068
    %v2217 = vsel %vm76, %v2204, %v2070
    %v2218 = vsel %vm76, %v2205, %v2072
    %v2219 = vsel %vm76, %v2206, %v2074
    %v2220 = vsel %vm76, %v2207, %v2076
    %v2221 = vsel %vm76, %v2208, %v2078
    %vm2222 = vcmask 195584
    %v2223 = vsel %vm2222, %v2209, %v2106
    %v2224 = vsel %vm2222, %v2210, %v2108
    %v2225 = vsel %vm2222, %v2211, %v2110
    %v2226 = vsel %vm2222, %v2212, %v2112
    %v2227 = vsel %vm2222, %v2213, %v2114
    %v2228 = vsel %vm2222, %v2214, %v2116
    %v2229 = vsel %vm2222, %v2215, %v2118
    %v2230 = vsel %vm2222, %v2216, %v2120
    %v2231 = vsel %vm2222, %v2217, %v2122
    %v2232 = vsel %vm2222, %v2218, %v2124
    %v2233 = vsel %vm2222, %v2219, %v2126
    %v2234 = vsel %vm2222, %v2220, %v2128
    %v2235 = vsel %vm2222, %v2221, %v2130
    %v2236 = vsel %vm1664, %v2223, %v2158
    %v2237 = vsel %vm1664, %v2224, %v2160
    %v2238 = vsel %vm1664, %v2225, %v2162
    %v2239 = vsel %vm1664, %v2226, %v2164
    %v2240 = vsel %vm1664, %v2227, %v2166
    %v2241 = vsel %vm1664, %v2228, %v2168
    %v2242 = vsel %vm1664, %v2229, %v2170
    %v2243 = vsel %vm1664, %v2230, %v2172
    %v2244 = vsel %vm1664, %v2231, %v2174
    %v2245 = vsel %vm1664, %v2232, %v2176
    %v2246 = vsel %vm1664, %v2233, %v2178
    %v2247 = vsel %vm1664, %v2234, %v2180
    %v2248 = vsel %vm1664, %v2235, %v2182
    %vm2249 = vcmask 326656
    %v2250 = vsel %vm2249, %v2236, 0.0
    %v2251 = vsel %vm2249, %v2237, 0.0
    %v2252 = vsel %vm2249, %v2238, 0.0
    %v2253 = vsel %vm2249, %v2239, 0.0
    %v2254 = vsel %vm2249, %v2240, 0.0
    %v2255 = vsel %vm2249, %v2241, 0.0
    %v2256 = vsel %vm2249, %v2242, 0.0
    %v2257 = vsel %vm2249, %v2243, 0.0
    %v2258 = vsel %vm2249, %v2244, 0.0
    %v2259 = vsel %vm2249, %v2245, 0.0
    %v2260 = vsel %vm2249, %v2246, 0.0
    %v2261 = vsel %vm2249, %v2247, 0.0
    %v2262 = vsel %vm2249, %v2248, 0.0
    %2263 = vst [vmem:[#allocation2] sm:$0xff] %v2250
    %2264 = vst [vmem:[#allocation2 + $0x8] sm:$0xff] %v2251
    %2265 = vst [vmem:[#allocation2 + $0x10] sm:$0xff] %v2252
    %2266 = vst [vmem:[#allocation2 + $0x18] sm:$0xff] %v2253
    %2267 = vst [vmem:[#allocation2 + $0x20] sm:$0xff] %v2254
    %2268 = vst [vmem:[#allocation2 + $0x28] sm:$0xff] %v2255
    %2269 = vst [vmem:[#allocation2 + $0x30] sm:$0xff] %v2256
    %2270 = vst [vmem:[#allocation2 + $0x38] sm:$0xff] %v2257
    %2271 = vst [vmem:[#allocation2 + $0x40] sm:$0xff] %v2258
    %2272 = vst [vmem:[#allocation2 + $0x48] sm:$0xff] %v2259
    %2273 = vst [vmem:[#allocation2 + $0x50] sm:$0xff] %v2260
    %2274 = vst [vmem:[#allocation2 + $0x58] sm:$0xff] %v2261
    %2275 = vst [vmem:[#allocation2 + $0x60] sm:$0xff] %v2262
    // Predicated region
    $region66: #{tpu_custom_call.1} parent=1 // pred_check
      _
    $region67: #{tpu_custom_call.1} parent=1 // pred_check_branch
      %2277 = sbr.rel (0) target = $region69
    $region68: #{tpu_custom_call.1} parent=1 // pred_region
      %s2279 = ssub.s32 1664, 1664
      %2280 = vsyncadd [#allocation3], %s2279
      %s2281 = sshll.u32 [#allocation2], 4
      %s2282 = int_to_ptr.vmem [resolvable:$true] %s2281
      %2287 = dma.vmem_to_hbm [thread:$0]  %s2282, 1664, %s16, [#allocation3], 128, 128, 8
    $region69: #{tpu_custom_call.1} parent=1 // pred_fallthru
      _
    // Predicated region
    $region70: #{tpu_custom_call.1} parent=1 // pred_check
      _
    $region71: #{tpu_custom_call.1} parent=1 // pred_check_branch
      %2289 = sbr.rel (0) target = $region73
    $region72: #{tpu_custom_call.1} parent=1 // pred_region
      %2290 = dma.done [#allocation3], 1664
    $region73: #{tpu_custom_call.1} parent=1 // pred_fallthru
      _
    %2291 = vsyncpa [#allocation3], 1

</llo_original>
